<compile_context>
chip_gen: v7x
topology: tpu7x:2x2x1
jax: 0.10.0
libtpu: 0.0.40
codegen_flags: <defaults>
</compile_context>

<pallas_src>
import functools

import jax
import jax.numpy as jnp
from jax.experimental import pallas as pl
from jax.experimental.pallas import tpu as pltpu


H1 = 400     # layer_1 / layer_4 output width
H1P = 512    # padded per-stream width (4 * 128 -> aligned lane slices)
H2 = 300     # layer_2 / layer_5 output width
H2P = 384    # padded width (3 * 128 -> lane-dense)


def _critic_kernel(xu_ref, w14_ref, b14_ref, w2_ref, b2_ref, w5_ref, b5_ref,
                   wh_ref, bh_ref, out1_ref, out2_ref, *, action_dim, batch):
    bpad, head_w = out1_ref.shape

    # ---- fused layer 1 for BOTH streams: lanes [0:512)=stream1, [512:1024)=stream2.
    xu = xu_ref[...].astype(jnp.bfloat16)                                  # (Bp, S+A)
    h = jnp.dot(xu, w14_ref[...], preferred_element_type=jnp.float32)
    h = jnp.maximum(h + b14_ref[...], 0.0)                                 # (Bp, 1024) f32

    hb = h.astype(jnp.bfloat16)
    h1 = hb[:, :H1P]                                                       # 128-aligned slices
    h2 = hb[:, H1P:]

    # ---- layer 2 / layer 5 (distinct weights); 384-wide lane-dense outputs.
    g1 = jnp.maximum(
        jnp.dot(h1, w2_ref[...], preferred_element_type=jnp.float32) + b2_ref[...], 0.0)
    g2 = jnp.maximum(
        jnp.dot(h2, w5_ref[...], preferred_element_type=jnp.float32) + b5_ref[...], 0.0)

    # ---- shared dueling head: ONE matmul for both streams (stack along sublanes).
    #      (wh is shared, matching the PyTorch forward() which uses value_1 /
    #      advanatge_1 for stream 2 as well.)
    g = jnp.concatenate([g1, g2], axis=0).astype(jnp.bfloat16)             # (2*Bp, 384)
    head = jnp.dot(g, wh_ref[...], preferred_element_type=jnp.float32) + bh_ref[...]

    # ---- dueling combine: q = value + advantage - mean(advantage); the mean is a
    #      GLOBAL mean over the (batch, action_dim) block (torch.mean semantics).
    #      Mask out padded batch rows and non-advantage lanes.
    row = jax.lax.broadcasted_iota(jnp.int32, (bpad, head_w), 0)
    lane = jax.lax.broadcasted_iota(jnp.int32, (bpad, head_w), 1)
    valid = (row < batch) & (lane < action_dim)
    inv_n = 1.0 / float(batch * action_dim)

    def dueling(hd):
        v = hd[:, action_dim:action_dim + 1]                               # (Bp, 1) value lane
        mean_a = jnp.sum(jnp.where(valid, hd, 0.0)) * inv_n
        # compute on the full 128-lane block so the store stays unmasked; the
        # wrapper slices lanes [0:A] (pad lanes/rows carry harmless garbage).
        return hd + v - mean_a

    out1_ref[...] = dueling(head[:bpad])
    out2_ref[...] = dueling(head[bpad:])


def prepare_critic_params(p, state_dim, action_dim):
    """One-time weight prep (transpose / pad / fuse / bf16-cast). NOT the hot path."""
    S, A = state_dim, action_dim
    head_w = 128 * ((A + 1 + 127) // 128)                                  # >= 128, lane multiple

    # fused layer 1: [w1 | 0 | w4 | 0] -> (S+A, 1024)
    w14 = jnp.zeros((S + A, 2 * H1P), jnp.float32)
    w14 = w14.at[:, :H1].set(p["w1"].T).at[:, H1P:H1P + H1].set(p["w4"].T)
    b14 = jnp.zeros((1, 2 * H1P), jnp.float32)
    b14 = b14.at[0, :H1].set(p["b1"]).at[0, H1P:H1P + H1].set(p["b4"])

    # layer 2 / layer 5: contraction padded 400->512, output padded 300->384
    w2 = jnp.zeros((H1P, H2P), jnp.float32).at[:H1, :H2].set(p["w2"].T)
    w5 = jnp.zeros((H1P, H2P), jnp.float32).at[:H1, :H2].set(p["w5"].T)
    b2 = jnp.zeros((1, H2P), jnp.float32).at[0, :H2].set(p["b2"])
    b5 = jnp.zeros((1, H2P), jnp.float32).at[0, :H2].set(p["b5"])

    # fused head [advantage | value | 0-pad]; value_2 / advanatge_2 unused (as in PyTorch)
    wh = jnp.zeros((H2P, head_w), jnp.float32)
    wh = wh.at[:H2, :A].set(p["wa1"].T).at[:H2, A:A + 1].set(p["wv1"].T)
    bh = jnp.zeros((1, head_w), jnp.float32)
    bh = bh.at[0, :A].set(p["ba1"]).at[0, A].set(p["bv1"][0])

    # bf16 matmul operands; biases stay f32 (elementwise math is f32 in-kernel).
    return dict(
        w14=w14.astype(jnp.bfloat16), b14=b14,
        w2=w2.astype(jnp.bfloat16), b2=b2,
        w5=w5.astype(jnp.bfloat16), b5=b5,
        wh=wh.astype(jnp.bfloat16), bh=bh,
    )


def critic_forward(x, u, prep):
    """x: (B, state_dim), u: (B, action_dim), prep: prepare_critic_params output.
    Returns (q1, q2), each (B, action_dim)."""
    B = x.shape[0]
    A = u.shape[1]
    head_w = prep["wh"].shape[1]
    Bp = ((B + 7) // 8) * 8                                                # f32 sublane multiple

    xu = jnp.concatenate([x, u], axis=1)                                   # tiny (B, S+A) op
    if Bp != B:
        xu = jnp.pad(xu, ((0, Bp - B), (0, 0)))

    kernel = functools.partial(_critic_kernel, action_dim=A, batch=B)
    vmem = pl.BlockSpec(memory_space=pltpu.MemorySpace.VMEM)
    out1, out2 = pl.pallas_call(
        kernel,
        out_shape=(jax.ShapeDtypeStruct((Bp, head_w), jnp.float32),
                   jax.ShapeDtypeStruct((Bp, head_w), jnp.float32)),
        in_specs=[vmem] * 9,
        out_specs=(vmem, vmem),
    )(xu, prep["w14"], prep["b14"], prep["w2"], prep["b2"],
      prep["w5"], prep["b5"], prep["wh"], prep["bh"])
    return out1[:B, :A], out2[:B, :A]


def critic_Q1(x, u, prep):
    """Equivalent of Critic.Q1 (stream 1 only)."""
    return critic_forward(x, u, prep)[0]


def init_params(key, state_dim, action_dim):
    """Deterministic init matching nn.Linear shapes (uniform +/- 1/sqrt(fan_in))."""
    D = state_dim + action_dim

    def linear(key, out_f, in_f):
        kw, kb = jax.random.split(key)
        bound = 1.0 / jnp.sqrt(in_f)
        w = jax.random.uniform(kw, (out_f, in_f), jnp.float32, -bound, bound)
        b = jax.random.uniform(kb, (out_f,), jnp.float32, -bound, bound)
        return w, b

    keys = jax.random.split(key, 8)
    w1, b1 = linear(keys[0], 400, D)
    w2, b2 = linear(keys[1], 300, 400)
    wv1, bv1 = linear(keys[2], 1, 300)
    wa1, ba1 = linear(keys[3], action_dim, 300)
    w4, b4 = linear(keys[4], 400, D)
    w5, b5 = linear(keys[5], 300, 400)
    # value_2 / advanatge_2 exist in __init__ but are unused in forward().
    wv2, bv2 = linear(keys[6], 1, 300)
    wa2, ba2 = linear(keys[7], action_dim, 300)
    return dict(
        w1=w1, b1=b1, w2=w2, b2=b2, wv1=wv1, bv1=bv1, wa1=wa1, ba1=ba1,
        w4=w4, b4=b4, w5=w5, b5=b5, wv2=wv2, bv2=bv2, wa2=wa2, ba2=ba2,
    )


def critic_forward_ref(x, u, p):
    """Pure-JAX f32 reference mirroring the PyTorch forward() exactly."""
    xu = jnp.concatenate([x, u], axis=1)
    h1 = jax.nn.relu(xu @ p["w1"].T + p["b1"])
    h1 = jax.nn.relu(h1 @ p["w2"].T + p["b2"])
    v1 = h1 @ p["wv1"].T + p["bv1"]
    a1 = h1 @ p["wa1"].T + p["ba1"]
    h2 = jax.nn.relu(xu @ p["w4"].T + p["b4"])
    h2 = jax.nn.relu(h2 @ p["w5"].T + p["b5"])
    v2 = h2 @ p["wv1"].T + p["bv1"]          # original code uses value_1 for stream 2
    a2 = h2 @ p["wa1"].T + p["ba1"]          # original code uses advanatge_1 for stream 2
    q1 = v1 + a1 - jnp.mean(a1)
    q2 = v2 + a2 - jnp.mean(a2)
    return q1, q2


def critic_forward_ref_bf16(x, u, p):
    """Reference emulating the kernel's numerics: bf16 matmul operands, f32 accumulation."""
    bf = lambda a: a.astype(jnp.bfloat16)
    dot = lambda a, b: jnp.dot(bf(a), bf(b), preferred_element_type=jnp.float32)
    xu = jnp.concatenate([x, u], axis=1)
    h1 = jax.nn.relu(dot(xu, p["w1"].T) + p["b1"])
    g1 = jax.nn.relu(dot(h1, p["w2"].T) + p["b2"])
    h2 = jax.nn.relu(dot(xu, p["w4"].T) + p["b4"])
    g2 = jax.nn.relu(dot(h2, p["w5"].T) + p["b5"])
    v1 = dot(g1, p["wv1"].T) + p["bv1"]
    a1 = dot(g1, p["wa1"].T) + p["ba1"]
    v2 = dot(g2, p["wv1"].T) + p["bv1"]
    a2 = dot(g2, p["wa1"].T) + p["ba1"]
    q1 = v1 + a1 - jnp.mean(a1)
    q2 = v2 + a2 - jnp.mean(a2)
    return q1, q2


if __name__ == "__main__":
    state_dim, action_dim, batch = 16, 8, 2
    key = jax.random.PRNGKey(0)
    kp, kx, ku = jax.random.split(key, 3)

    params = init_params(kp, state_dim, action_dim)
    x = jax.random.normal(kx, (batch, state_dim), jnp.float32)
    u = jax.random.normal(ku, (batch, action_dim), jnp.float32)

    # One-time weight preparation (kept out of the per-call hot path).
    prep = jax.block_until_ready(prepare_critic_params(params, state_dim, action_dim))

    fwd = jax.jit(critic_forward)
    q1, q2 = fwd(x, u, prep)
    jax.block_until_ready((q1, q2))

    assert q1.shape == (batch, action_dim) and q2.shape == (batch, action_dim)

    # Tight check vs. a reference with identical numerics (bf16 weights, f32 acc).
    b1_ref, b2_ref = critic_forward_ref_bf16(x, u, params)
    assert jnp.allclose(q1, b1_ref, atol=2e-3, rtol=2e-3)
    assert jnp.allclose(q2, b2_ref, atol=2e-3, rtol=2e-3)

    # Semantic check vs. the exact f32 PyTorch-equivalent reference
    # (tolerance accounts for bf16 weight quantization).
    r1, r2 = critic_forward_ref(x, u, params)
    assert jnp.allclose(q1, r1, atol=3e-2, rtol=3e-2)
    assert jnp.allclose(q2, r2, atol=3e-2, rtol=3e-2)

    print("KERNEL_OK")
</pallas_src>

<mosaic_0001>
module attributes {stable_mosaic.version = 11 : i64} {
  func.func @_critic_kernel(%arg0: memref<8x24xf32, #tpu.memory_space<vmem>>, %arg1: memref<24x1024xbf16, #tpu.memory_space<vmem>>, %arg2: memref<1x1024xf32, #tpu.memory_space<vmem>>, %arg3: memref<512x384xbf16, #tpu.memory_space<vmem>>, %arg4: memref<1x384xf32, #tpu.memory_space<vmem>>, %arg5: memref<512x384xbf16, #tpu.memory_space<vmem>>, %arg6: memref<1x384xf32, #tpu.memory_space<vmem>>, %arg7: memref<384x128xbf16, #tpu.memory_space<vmem>>, %arg8: memref<1x128xf32, #tpu.memory_space<vmem>>, %arg9: memref<8x128xf32, #tpu.memory_space<vmem>>, %arg10: memref<8x128xf32, #tpu.memory_space<vmem>>) attributes {dimension_semantics = [], scalar_prefetch = 0 : i64, scratch_operands = 0 : i64, tpu.core_type = #tpu.core_type<tc>} {
    %c0 = arith.constant 0 : index
    %c0_0 = arith.constant 0 : index
    %0 = vector.load %arg0[%c0, %c0_0] : memref<8x24xf32, #tpu.memory_space<vmem>>, vector<8x24xf32>
    %1 = arith.truncf %0 : vector<8x24xf32> to vector<8x24xbf16>
    %c0_1 = arith.constant 0 : index
    %c0_2 = arith.constant 0 : index
    %2 = vector.load %arg1[%c0_1, %c0_2] : memref<24x1024xbf16, #tpu.memory_space<vmem>>, vector<24x1024xbf16>
    %cst = arith.constant dense<0.000000e+00> : vector<8x1024xf32>
    %3 = tpu.matmul %1, %2, %cst {dimension_numbers = #tpu.dot_dimension_numbers<[1], [0], [0], [1], [0, 0, 1, 1], [], []>} : vector<8x24xbf16>, vector<24x1024xbf16>, vector<8x1024xf32> -> vector<8x1024xf32>
    %c0_3 = arith.constant 0 : index
    %c0_4 = arith.constant 0 : index
    %4 = vector.load %arg2[%c0_3, %c0_4] : memref<1x1024xf32, #tpu.memory_space<vmem>>, vector<1x1024xf32>
    %5 = vector.broadcast %4 : vector<1x1024xf32> to vector<8x1024xf32>
    %6 = arith.addf %3, %5 : vector<8x1024xf32>
    %cst_5 = arith.constant 0.000000e+00 : f32
    %7 = vector.broadcast %cst_5 : f32 to vector<8x1024xf32>
    %8 = arith.maximumf %6, %7 : vector<8x1024xf32>
    %9 = arith.truncf %8 : vector<8x1024xf32> to vector<8x1024xbf16>
    %10 = vector.extract_strided_slice %9 {offsets = [0, 0], sizes = [8, 512], strides = [1, 1]} : vector<8x1024xbf16> to vector<8x512xbf16>
    %11 = vector.extract_strided_slice %9 {offsets = [0, 512], sizes = [8, 512], strides = [1, 1]} : vector<8x1024xbf16> to vector<8x512xbf16>
    %c0_6 = arith.constant 0 : index
    %c0_7 = arith.constant 0 : index
    %12 = vector.load %arg3[%c0_6, %c0_7] : memref<512x384xbf16, #tpu.memory_space<vmem>>, vector<512x384xbf16>
    %cst_8 = arith.constant dense<0.000000e+00> : vector<8x384xf32>
    %13 = tpu.matmul %10, %12, %cst_8 {dimension_numbers = #tpu.dot_dimension_numbers<[1], [0], [0], [1], [0, 0, 1, 1], [], []>} : vector<8x512xbf16>, vector<512x384xbf16>, vector<8x384xf32> -> vector<8x384xf32>
    %c0_9 = arith.constant 0 : index
    %c0_10 = arith.constant 0 : index
    %14 = vector.load %arg4[%c0_9, %c0_10] : memref<1x384xf32, #tpu.memory_space<vmem>>, vector<1x384xf32>
    %15 = vector.broadcast %14 : vector<1x384xf32> to vector<8x384xf32>
    %16 = arith.addf %13, %15 : vector<8x384xf32>
    %cst_11 = arith.constant 0.000000e+00 : f32
    %17 = vector.broadcast %cst_11 : f32 to vector<8x384xf32>
    %18 = arith.maximumf %16, %17 : vector<8x384xf32>
    %c0_12 = arith.constant 0 : index
    %c0_13 = arith.constant 0 : index
    %19 = vector.load %arg5[%c0_12, %c0_13] : memref<512x384xbf16, #tpu.memory_space<vmem>>, vector<512x384xbf16>
    %cst_14 = arith.constant dense<0.000000e+00> : vector<8x384xf32>
    %20 = tpu.matmul %11, %19, %cst_14 {dimension_numbers = #tpu.dot_dimension_numbers<[1], [0], [0], [1], [0, 0, 1, 1], [], []>} : vector<8x512xbf16>, vector<512x384xbf16>, vector<8x384xf32> -> vector<8x384xf32>
    %c0_15 = arith.constant 0 : index
    %c0_16 = arith.constant 0 : index
    %21 = vector.load %arg6[%c0_15, %c0_16] : memref<1x384xf32, #tpu.memory_space<vmem>>, vector<1x384xf32>
    %22 = vector.broadcast %21 : vector<1x384xf32> to vector<8x384xf32>
    %23 = arith.addf %20, %22 : vector<8x384xf32>
    %cst_17 = arith.constant 0.000000e+00 : f32
    %24 = vector.broadcast %cst_17 : f32 to vector<8x384xf32>
    %25 = arith.maximumf %23, %24 : vector<8x384xf32>
    %26 = tpu.concatenate %18, %25 in 0 : vector<8x384xf32>, vector<8x384xf32> -> vector<16x384xf32>
    %27 = arith.truncf %26 : vector<16x384xf32> to vector<16x384xbf16>
    %c0_18 = arith.constant 0 : index
    %c0_19 = arith.constant 0 : index
    %28 = vector.load %arg7[%c0_18, %c0_19] : memref<384x128xbf16, #tpu.memory_space<vmem>>, vector<384x128xbf16>
    %cst_20 = arith.constant dense<0.000000e+00> : vector<16x128xf32>
    %29 = tpu.matmul %27, %28, %cst_20 {dimension_numbers = #tpu.dot_dimension_numbers<[1], [0], [0], [1], [0, 0, 1, 1], [], []>} : vector<16x384xbf16>, vector<384x128xbf16>, vector<16x128xf32> -> vector<16x128xf32>
    %c0_21 = arith.constant 0 : index
    %c0_22 = arith.constant 0 : index
    %30 = vector.load %arg8[%c0_21, %c0_22] : memref<1x128xf32, #tpu.memory_space<vmem>>, vector<1x128xf32>
    %31 = vector.broadcast %30 : vector<1x128xf32> to vector<16x128xf32>
    %32 = arith.addf %29, %31 : vector<16x128xf32>
    %33 = tpu.iota {dimensions = array<i32: 0>} : vector<8x128xi32>
    %34 = tpu.iota {dimensions = array<i32: 1>} : vector<8x128xi32>
    %c2_i32 = arith.constant 2 : i32
    %35 = vector.broadcast %c2_i32 : i32 to vector<8x128xi32>
    %36 = arith.cmpi slt, %33, %35 : vector<8x128xi32>
    %c8_i32 = arith.constant 8 : i32
    %37 = vector.broadcast %c8_i32 : i32 to vector<8x128xi32>
    %38 = arith.cmpi slt, %34, %37 : vector<8x128xi32>
    %39 = arith.andi %36, %38 : vector<8x128xi1>
    %40 = vector.extract_strided_slice %32 {offsets = [0, 0], sizes = [8, 128], strides = [1, 1]} : vector<16x128xf32> to vector<8x128xf32>
    %41 = vector.extract_strided_slice %40 {offsets = [0, 8], sizes = [8, 1], strides = [1, 1]} : vector<8x128xf32> to vector<8x1xf32>
    %cst_23 = arith.constant 0.000000e+00 : f32
    %42 = vector.broadcast %cst_23 : f32 to vector<8x128xf32>
    %43 = arith.select %39, %40, %42 : vector<8x128xi1>, vector<8x128xf32>
    %44 = vector.shape_cast %43 : vector<8x128xf32> to vector<1x8x128xf32>
    %cst_24 = arith.constant dense<0.000000e+00> : vector<1xf32>
    %45 = vector.multi_reduction <add>, %44, %cst_24 [1, 2] : vector<1x8x128xf32> to vector<1xf32>
    %46 = vector.shape_cast %45 : vector<1xf32> to vector<1x1x1xf32>
    %47 = vector.extract %46[0, 0, 0] : f32 from vector<1x1x1xf32>
    %cst_25 = arith.constant 6.250000e-02 : f32
    %48 = arith.mulf %47, %cst_25 : f32
    %49 = vector.broadcast %41 : vector<8x1xf32> to vector<8x128xf32>
    %50 = arith.addf %40, %49 : vector<8x128xf32>
    %51 = vector.broadcast %48 : f32 to vector<8x128xf32>
    %52 = arith.subf %50, %51 : vector<8x128xf32>
    %c0_26 = arith.constant 0 : index
    %c0_27 = arith.constant 0 : index
    %53 = vector.load %arg9[%c0_26, %c0_27] : memref<8x128xf32, #tpu.memory_space<vmem>>, vector<8x128xf32>
    tpu.vector_store %arg9[%c0_26, %c0_27], %52 {strides = array<i32>} : memref<8x128xf32, #tpu.memory_space<vmem>>, vector<8x128xf32>,
    %54 = vector.extract_strided_slice %32 {offsets = [8, 0], sizes = [8, 128], strides = [1, 1]} : vector<16x128xf32> to vector<8x128xf32>
    %55 = vector.extract_strided_slice %54 {offsets = [0, 8], sizes = [8, 1], strides = [1, 1]} : vector<8x128xf32> to vector<8x1xf32>
    %cst_28 = arith.constant 0.000000e+00 : f32
    %56 = vector.broadcast %cst_28 : f32 to vector<8x128xf32>
    %57 = arith.select %39, %54, %56 : vector<8x128xi1>, vector<8x128xf32>
    %58 = vector.shape_cast %57 : vector<8x128xf32> to vector<1x8x128xf32>
    %cst_29 = arith.constant dense<0.000000e+00> : vector<1xf32>
    %59 = vector.multi_reduction <add>, %58, %cst_29 [1, 2] : vector<1x8x128xf32> to vector<1xf32>
    %60 = vector.shape_cast %59 : vector<1xf32> to vector<1x1x1xf32>
    %61 = vector.extract %60[0, 0, 0] : f32 from vector<1x1x1xf32>
    %cst_30 = arith.constant 6.250000e-02 : f32
    %62 = arith.mulf %61, %cst_30 : f32
    %63 = vector.broadcast %55 : vector<8x1xf32> to vector<8x128xf32>
    %64 = arith.addf %54, %63 : vector<8x128xf32>
    %65 = vector.broadcast %62 : f32 to vector<8x128xf32>
    %66 = arith.subf %64, %65 : vector<8x128xf32>
    %c0_31 = arith.constant 0 : index
    %c0_32 = arith.constant 0 : index
    %67 = vector.load %arg10[%c0_31, %c0_32] : memref<8x128xf32, #tpu.memory_space<vmem>>, vector<8x128xf32>
    tpu.vector_store %arg10[%c0_31, %c0_32], %66 {strides = array<i32>} : memref<8x128xf32, #tpu.memory_space<vmem>>, vector<8x128xf32>,
    return
  }
}

</mosaic_0001>

<llo_original>
// kernel: critic_forward.1
$region0: #{critic_forward.1}
  #allocation0 [shape = 'u32[]', space=smem, size = 0x4, offset = 0x4, fixed_abs, tag = 'smem constant byte address 0x4 - core index']
  #allocation1 [shape = 'u32[144,128]{1,0:T(1,128)}', space=vmem, size = 0x12000, scoped, tag = 'internal scratch']
  %s0 = inlined_call_operand.vmem [shape: f32[8,24], index: 0, kind: input, shape index: {}]
  %s1 = inlined_call_operand.hbm [shape: bf16[24,1024], index: 1, kind: input, shape index: {}]
  %s2 = inlined_call_operand.vmem [shape: f32[1,1024], index: 2, kind: input, shape index: {}]
  %s3 = inlined_call_operand.hbm [shape: bf16[512,384], index: 3, kind: input, shape index: {}]
  %s4 = inlined_call_operand.vmem [shape: f32[1,384], index: 4, kind: input, shape index: {}]
  %s5 = inlined_call_operand.hbm [shape: bf16[512,384], index: 5, kind: input, shape index: {}]
  %s6 = inlined_call_operand.vmem [shape: f32[1,384], index: 6, kind: input, shape index: {}]
  %s7 = inlined_call_operand.hbm [shape: bf16[384,128], index: 7, kind: input, shape index: {}]
  %s8 = inlined_call_operand.vmem [shape: f32[1,128], index: 8, kind: input, shape index: {}]
  %s9 = inlined_call_operand.vmem [shape: f32[8,128], index: 9, kind: output, shape index: {0}]
  %s10 = inlined_call_operand.vmem [shape: f32[8,128], index: 10, kind: output, shape index: {1}]
  %11 = xla_tuple %s9, %s10
  %s12 = sld [smem:[#allocation0]]
  $region70: #{critic_forward.1} parent=0
    _
  %s14 = ssub.s32 1, %s12
  %s15 = scalar_select 0, %s14, %s12
  $region1: #{critic_forward.1} parent=0
    #allocation2 [shape = 'u8[49152]{0}', space=vmem, size = 0xc000, scoped, tag = 'input window, operand 1, single buffered']
    #allocation3 [shape = 's32[1]{0}', space=sflag, size = 0x4, scoped, tag = 'scoped memory for critic_forward.1']
    #allocation4 [shape = 'u8[393216]{0}', space=vmem, size = 0x60000, scoped, tag = 'input window, operand 3, single buffered']
    #allocation5 [shape = 's32[1]{0}', space=sflag, size = 0x4, scoped, tag = 'scoped memory for critic_forward.1']
    #allocation6 [shape = 'u8[393216]{0}', space=vmem, size = 0x60000, scoped, tag = 'input window, operand 5, single buffered']
    #allocation7 [shape = 'u8[98304]{0}', space=vmem, size = 0x18000, scoped, tag = 'input window, operand 7, single buffered']
    #allocation8 [shape = 's32[1]{0}', space=sflag, size = 0x4, scoped, tag = 'scoped memory for critic_forward.1']
    %16 = vsyncpa [#allocation3], 0
    %17 = vsyncpa [#allocation5], 0
    %18 = vsyncpa [#allocation8], 0
    // Predicated region
    $region2: #{critic_forward.1} parent=1 // pred_check
      _
    $region3: #{critic_forward.1} parent=1 // pred_check_branch
      %20 = sbr.rel (0) target = $region5
    $region4: #{critic_forward.1} parent=1 // pred_region
      _
    $region5: #{critic_forward.1} parent=1 // pred_fallthru
      _
    // Predicated region
    $region6: #{critic_forward.1} parent=1 // pred_check
      _
    $region7: #{critic_forward.1} parent=1 // pred_check_branch
      %22 = sbr.rel (0) target = $region9
    $region8: #{critic_forward.1} parent=1 // pred_region
      %s24 = ssub.s32 1536, 1536
      %25 = vsyncadd [#allocation3], %s24
      %s26 = sshll.u32 [#allocation2], 4
      %s27 = int_to_ptr.vmem [resolvable:$true] %s26
      %32 = dma.hbm_to_vmem [thread:$0]  %s1, 1536, %s27, [#allocation3], 512, 512, 32
    $region9: #{critic_forward.1} parent=1 // pred_fallthru
      _
    // Predicated region
    $region10: #{critic_forward.1} parent=1 // pred_check
      _
    $region11: #{critic_forward.1} parent=1 // pred_check_branch
      %34 = sbr.rel (0) target = $region13
    $region12: #{critic_forward.1} parent=1 // pred_region
      _
    $region13: #{critic_forward.1} parent=1 // pred_fallthru
      _
    // Predicated region
    $region14: #{critic_forward.1} parent=1 // pred_check
      _
    $region15: #{critic_forward.1} parent=1 // pred_check_branch
      %36 = sbr.rel (0) target = $region17
    $region16: #{critic_forward.1} parent=1 // pred_region
      %s38 = ssub.s32 12288, 12288
      %39 = vsyncadd [#allocation5], %s38
      %s40 = sshll.u32 [#allocation4], 4
      %s41 = int_to_ptr.vmem [resolvable:$true] %s40
      %46 = dma.hbm_to_vmem [thread:$0]  %s3, 12288, %s41, [#allocation5], 192, 192, 12
    $region17: #{critic_forward.1} parent=1 // pred_fallthru
      _
    // Predicated region
    $region18: #{critic_forward.1} parent=1 // pred_check
      _
    $region19: #{critic_forward.1} parent=1 // pred_check_branch
      %48 = sbr.rel (0) target = $region21
    $region20: #{critic_forward.1} parent=1 // pred_region
      _
    $region21: #{critic_forward.1} parent=1 // pred_fallthru
      _
    // Predicated region
    $region22: #{critic_forward.1} parent=1 // pred_check
      _
    $region23: #{critic_forward.1} parent=1 // pred_check_branch
      %50 = sbr.rel (0) target = $region25
    $region24: #{critic_forward.1} parent=1 // pred_region
      %s52 = ssub.s32 12288, 12288
      %53 = vsyncadd [#allocation5], %s52
      %s54 = sshll.u32 [#allocation6], 4
      %s55 = int_to_ptr.vmem [resolvable:$true] %s54
      %60 = dma.hbm_to_vmem [thread:$0]  %s5, 12288, %s55, [#allocation5], 192, 192, 12
    $region25: #{critic_forward.1} parent=1 // pred_fallthru
      _
    // Predicated region
    $region26: #{critic_forward.1} parent=1 // pred_check
      _
    $region27: #{critic_forward.1} parent=1 // pred_check_branch
      %62 = sbr.rel (0) target = $region29
    $region28: #{critic_forward.1} parent=1 // pred_region
      _
    $region29: #{critic_forward.1} parent=1 // pred_fallthru
      _
    // Predicated region
    $region30: #{critic_forward.1} parent=1 // pred_check
      _
    $region31: #{critic_forward.1} parent=1 // pred_check_branch
      %64 = sbr.rel (0) target = $region33
    $region32: #{critic_forward.1} parent=1 // pred_region
      %s66 = ssub.s32 3072, 3072
      %67 = vsyncadd [#allocation8], %s66
      %s68 = sshll.u32 [#allocation7], 4
      %s69 = int_to_ptr.vmem [resolvable:$true] %s68
      %74 = dma.hbm_to_vmem [thread:$0]  %s7, 3072, %s69, [#allocation8], 64, 64, 4
    $region33: #{critic_forward.1} parent=1 // pred_fallthru
      _
    // Predicated region
    $region34: #{critic_forward.1} parent=1 // pred_check
      _
    $region35: #{critic_forward.1} parent=1 // pred_check_branch
      %76 = sbr.rel (0) target = $region37
    $region36: #{critic_forward.1} parent=1 // pred_region
      _
    $region37: #{critic_forward.1} parent=1 // pred_fallthru
      _
    // Predicated region
    $region38: #{critic_forward.1} parent=1 // pred_check
      _
    $region39: #{critic_forward.1} parent=1 // pred_check_branch
      %78 = sbr.rel (0) target = $region41
    $region40: #{critic_forward.1} parent=1 // pred_region
      %79 = dma.done [#allocation3], 1536
    $region41: #{critic_forward.1} parent=1 // pred_fallthru
      _
    // Predicated region
    $region42: #{critic_forward.1} parent=1 // pred_check
      _
    $region43: #{critic_forward.1} parent=1 // pred_check_branch
      %81 = sbr.rel (0) target = $region45
    $region44: #{critic_forward.1} parent=1 // pred_region
      %82 = dma.done [#allocation5], 12288
    $region45: #{critic_forward.1} parent=1 // pred_fallthru
      _
    // Predicated region
    $region46: #{critic_forward.1} parent=1 // pred_check
      _
    $region47: #{critic_forward.1} parent=1 // pred_check_branch
      %84 = sbr.rel (0) target = $region49
    $region48: #{critic_forward.1} parent=1 // pred_region
      %85 = dma.done [#allocation5], 12288
    $region49: #{critic_forward.1} parent=1 // pred_fallthru
      _
    // Predicated region
    $region50: #{critic_forward.1} parent=1 // pred_check
      _
    $region51: #{critic_forward.1} parent=1 // pred_check_branch
      %87 = sbr.rel (0) target = $region53
    $region52: #{critic_forward.1} parent=1 // pred_region
      %88 = dma.done [#allocation8], 3072
    $region53: #{critic_forward.1} parent=1 // pred_fallthru
      _
    %v90 = vld [vmem:[%s0] sm:$0xff]
    %v91 = vpack.c.bf16 %v90, %v90
    %v92 = vld [vmem:[#allocation2] sm:$0xff]
    %v93 = vld [vmem:[#allocation2 + $0x8] sm:$0xff]
    %v94 = vld [vmem:[#allocation2 + $0x10] sm:$0xff]
    %v95 = vld [vmem:[#allocation2 + $0x18] sm:$0xff]
    %v96 = vld [vmem:[#allocation2 + $0x20] sm:$0xff]
    %v97 = vld [vmem:[#allocation2 + $0x28] sm:$0xff]
    %v98 = vld [vmem:[#allocation2 + $0x30] sm:$0xff]
    %v99 = vld [vmem:[#allocation2 + $0x38] sm:$0xff]
    %v100 = vld [vmem:[#allocation2 + $0x40] sm:$0xff]
    %v101 = vld [vmem:[#allocation2 + $0x48] sm:$0xff]
    %v102 = vld [vmem:[#allocation2 + $0x50] sm:$0xff]
    %v103 = vld [vmem:[#allocation2 + $0x58] sm:$0xff]
    %v104 = vld [vmem:[%s2] sm:$0xff]
    %v106 = vlaneseq
    %v107 = vshrl.u32 %v106, 7
    %v108 = vsub.s32 0, %v107
    %v109 = vrot.slane %v104, %v108
    %v110 = vlaneseq
    %v111 = vshrl.u32 %v110, 7
    %v112 = vsub.s32 1, %v111
    %v113 = vrot.slane %v104, %v112
    %v114 = vlaneseq
    %v115 = vshrl.u32 %v114, 7
    %v116 = vsub.s32 2, %v115
    %v117 = vrot.slane %v104, %v116
    %v118 = vlaneseq
    %v119 = vshrl.u32 %v118, 7
    %v120 = vsub.s32 3, %v119
    %v121 = vrot.slane %v104, %v120
    %v122 = vlaneseq
    %v123 = vshrl.u32 %v122, 7
    %v124 = vsub.s32 4, %v123
    %v125 = vrot.slane %v104, %v124
    %v126 = vlaneseq
    %v127 = vshrl.u32 %v126, 7
    %v128 = vsub.s32 5, %v127
    %v129 = vrot.slane %v104, %v128
    %v130 = vlaneseq
    %v131 = vshrl.u32 %v130, 7
    %v132 = vsub.s32 6, %v131
    %v133 = vrot.slane %v104, %v132
    %v134 = vlaneseq
    %v135 = vshrl.u32 %v134, 7
    %v136 = vsub.s32 7, %v135
    %v137 = vrot.slane %v104, %v136
    %v158 = vunpack.c.l.b16 %v92
    %v159 = vunpack.c.h.b16 %v92
    %v160 = vunpack.c.l.b16 %v93
    %v161 = vunpack.c.h.b16 %v93
    %v162 = vunpack.c.l.b16 %v94
    %v163 = vunpack.c.h.b16 %v94
    %v164 = vunpack.c.l.b16 %v95
    %v165 = vunpack.c.h.b16 %v95
    %v166 = vunpack.c.l.b16 %v96
    %v167 = vunpack.c.h.b16 %v96
    %v168 = vunpack.c.l.b16 %v97
    %v169 = vunpack.c.h.b16 %v97
    %v170 = vunpack.c.l.b16 %v98
    %v171 = vunpack.c.h.b16 %v98
    %v172 = vunpack.c.l.b16 %v99
    %v173 = vunpack.c.h.b16 %v99
    %v174 = vunpack.c.l.b16 %v100
    %v175 = vunpack.c.h.b16 %v100
    %v176 = vunpack.c.l.b16 %v101
    %v177 = vunpack.c.h.b16 %v101
    %v178 = vunpack.c.l.b16 %v102
    %v179 = vunpack.c.h.b16 %v102
    %v180 = vunpack.c.l.b16 %v103
    %v181 = vunpack.c.h.b16 %v103
    %v182 = vpack.c.b16 %v166, %v158
    %v183 = vpack.c.b16 %v167, %v159
    %v184 = vpack.c.b16 %v168, %v160
    %v185 = vpack.c.b16 %v169, %v161
    %v186 = vpack.c.b16 %v170, %v162
    %v187 = vpack.c.b16 %v171, %v163
    %v188 = vpack.c.b16 %v172, %v164
    %v189 = vpack.c.b16 %v173, %v165
    %v190 = vpack.c.b16 %v174, %v174
    %v191 = vpack.c.b16 %v175, %v175
    %v192 = vpack.c.b16 %v176, %v176
    %v193 = vpack.c.b16 %v177, %v177
    %v194 = vpack.c.b16 %v178, %v178
    %v195 = vpack.c.b16 %v179, %v179
    %v196 = vpack.c.b16 %v180, %v180
    %v197 = vpack.c.b16 %v181, %v181
    %vm206 = vcmask 195584
    %v208 = vsel %vm206, %v91, 0
    %vm210 = vcmask 1043456
    %v212 = vsel %vm210, %v190, 0
    %v215 = vsel %vm210, %v191, 0
    %v218 = vsel %vm210, %v192, 0
    %v221 = vsel %vm210, %v193, 0
    %v224 = vsel %vm210, %v194, 0
    %v227 = vsel %vm210, %v195, 0
    %v230 = vsel %vm210, %v196, 0
    %v233 = vsel %vm210, %v197, 0
    %235 = vmatprep.subr.bf16.mxu0 %v183
    %236 = vmatpush1.bf16.msra.mxu0 %v182
    %237 = vmatprep.subr.bf16.mxu0 %v215
    %238 = vmatpush1.bf16.msra.mxu0 %v212
    %239 = vmatprep.subr.bf16.mxu0 0
    %240 = vmatpush1.bf16.msra.mxu0 0
    %241 = vmatprep.subr.bf16.mxu0 0
    %242 = vmatpush1.bf16.msra.mxu0 0
    %243 = vmatprep.subr.bf16.mxu0 0
    %244 = vmatpush1.bf16.msra.mxu0 0
    %245 = vmatprep.subr.bf16.mxu0 0
    %246 = vmatpush1.bf16.msra.mxu0 0
    %247 = vmatprep.subr.bf16.mxu0 0
    %248 = vmatpush1.bf16.msra.mxu0 0
    %249 = vmatprep.subr.bf16.mxu0 0
    %250 = vmatpush1.bf16.msra.mxu0 0
    %251 = vmatprep.subr.bf16.mxu0 0
    %252 = vmatpush1.bf16.msra.mxu0 0
    %253 = vmatprep.subr.bf16.mxu0 0
    %254 = vmatpush1.bf16.msra.mxu0 0
    %255 = vmatprep.subr.bf16.mxu0 0
    %256 = vmatpush1.bf16.msra.mxu0 0
    %257 = vmatprep.subr.bf16.mxu0 0
    %258 = vmatpush1.bf16.msra.mxu0 0
    %259 = vmatprep.subr.bf16.mxu0 0
    %260 = vmatpush1.bf16.msra.mxu0 0
    %261 = vmatprep.subr.bf16.mxu0 0
    %262 = vmatpush1.bf16.msra.mxu0 0
    %263 = vmatprep.subr.bf16.mxu0 0
    %264 = vmatpush1.bf16.msra.mxu0 0
    %265 = vmatprep.subr.bf16.mxu0 0
    %266 = vmatpush1.bf16.msra.mxu0 0
    %267 = vmatprep.mubr.bf16.mxu0 0
    %268 = vmatmul.mubr.bf16.gmra.mrb[0].mxu0 %v208
    %v269 = vpop.f32.mrb[0].mxu0
    %v270 = vadd.f32 %v109, %v269
    %v271 = vpop.f32.mrb[0].mxu0
    %v272 = vadd.f32 %v113, %v271
    %v273 = vpop.f32.mrb[0].mxu0
    %v274 = vpop.f32.mrb[0].mxu0
    %275 = vdwg.mxu0
    %276 = vmatprep.subr.bf16.mxu0 %v185
    %277 = vmatpush1.bf16.msra.mxu0 %v184
    %278 = vmatprep.subr.bf16.mxu0 %v221
    %279 = vmatpush1.bf16.msra.mxu0 %v218
    %280 = vmatprep.subr.bf16.mxu0 0
    %281 = vmatpush1.bf16.msra.mxu0 0
    %282 = vmatprep.subr.bf16.mxu0 0
    %283 = vmatpush1.bf16.msra.mxu0 0
    %284 = vmatprep.subr.bf16.mxu0 0
    %285 = vmatpush1.bf16.msra.mxu0 0
    %286 = vmatprep.subr.bf16.mxu0 0
    %287 = vmatpush1.bf16.msra.mxu0 0
    %288 = vmatprep.subr.bf16.mxu0 0
    %289 = vmatpush1.bf16.msra.mxu0 0
    %290 = vmatprep.subr.bf16.mxu0 0
    %291 = vmatpush1.bf16.msra.mxu0 0
    %292 = vmatprep.subr.bf16.mxu0 0
    %293 = vmatpush1.bf16.msra.mxu0 0
    %294 = vmatprep.subr.bf16.mxu0 0
    %295 = vmatpush1.bf16.msra.mxu0 0
    %296 = vmatprep.subr.bf16.mxu0 0
    %297 = vmatpush1.bf16.msra.mxu0 0
    %298 = vmatprep.subr.bf16.mxu0 0
    %299 = vmatpush1.bf16.msra.mxu0 0
    %300 = vmatprep.subr.bf16.mxu0 0
    %301 = vmatpush1.bf16.msra.mxu0 0
    %302 = vmatprep.subr.bf16.mxu0 0
    %303 = vmatpush1.bf16.msra.mxu0 0
    %304 = vmatprep.subr.bf16.mxu0 0
    %305 = vmatpush1.bf16.msra.mxu0 0
    %306 = vmatprep.subr.bf16.mxu0 0
    %307 = vmatpush1.bf16.msra.mxu0 0
    %308 = vmatprep.mubr.bf16.mxu0 0
    %309 = vmatmul.mubr.bf16.gmra.mrb[0].mxu0 %v208
    %v310 = vpop.f32.mrb[0].mxu0
    %v311 = vadd.f32 %v117, %v310
    %v312 = vpop.f32.mrb[0].mxu0
    %v313 = vadd.f32 %v121, %v312
    %v314 = vpop.f32.mrb[0].mxu0
    %v315 = vpop.f32.mrb[0].mxu0
    %316 = vdwg.mxu0
    %317 = vmatprep.subr.bf16.mxu0 %v187
    %318 = vmatpush1.bf16.msra.mxu0 %v186
    %319 = vmatprep.subr.bf16.mxu0 %v227
    %320 = vmatpush1.bf16.msra.mxu0 %v224
    %321 = vmatprep.subr.bf16.mxu0 0
    %322 = vmatpush1.bf16.msra.mxu0 0
    %323 = vmatprep.subr.bf16.mxu0 0
    %324 = vmatpush1.bf16.msra.mxu0 0
    %325 = vmatprep.subr.bf16.mxu0 0
    %326 = vmatpush1.bf16.msra.mxu0 0
    %327 = vmatprep.subr.bf16.mxu0 0
    %328 = vmatpush1.bf16.msra.mxu0 0
    %329 = vmatprep.subr.bf16.mxu0 0
    %330 = vmatpush1.bf16.msra.mxu0 0
    %331 = vmatprep.subr.bf16.mxu0 0
    %332 = vmatpush1.bf16.msra.mxu0 0
    %333 = vmatprep.subr.bf16.mxu0 0
    %334 = vmatpush1.bf16.msra.mxu0 0
    %335 = vmatprep.subr.bf16.mxu0 0
    %336 = vmatpush1.bf16.msra.mxu0 0
    %337 = vmatprep.subr.bf16.mxu0 0
    %338 = vmatpush1.bf16.msra.mxu0 0
    %339 = vmatprep.subr.bf16.mxu0 0
    %340 = vmatpush1.bf16.msra.mxu0 0
    %341 = vmatprep.subr.bf16.mxu0 0
    %342 = vmatpush1.bf16.msra.mxu0 0
    %343 = vmatprep.subr.bf16.mxu0 0
    %344 = vmatpush1.bf16.msra.mxu0 0
    %345 = vmatprep.subr.bf16.mxu0 0
    %346 = vmatpush1.bf16.msra.mxu0 0
    %347 = vmatprep.subr.bf16.mxu0 0
    %348 = vmatpush1.bf16.msra.mxu0 0
    %349 = vmatprep.mubr.bf16.mxu0 0
    %350 = vmatmul.mubr.bf16.gmra.mrb[0].mxu0 %v208
    %v351 = vpop.f32.mrb[0].mxu0
    %v352 = vadd.f32 %v125, %v351
    %v353 = vpop.f32.mrb[0].mxu0
    %v354 = vadd.f32 %v129, %v353
    %v355 = vpop.f32.mrb[0].mxu0
    %v356 = vpop.f32.mrb[0].mxu0
    %357 = vdwg.mxu0
    %358 = vmatprep.subr.bf16.mxu0 %v189
    %359 = vmatpush1.bf16.msra.mxu0 %v188
    %360 = vmatprep.subr.bf16.mxu0 %v233
    %361 = vmatpush1.bf16.msra.mxu0 %v230
    %362 = vmatprep.subr.bf16.mxu0 0
    %363 = vmatpush1.bf16.msra.mxu0 0
    %364 = vmatprep.subr.bf16.mxu0 0
    %365 = vmatpush1.bf16.msra.mxu0 0
    %366 = vmatprep.subr.bf16.mxu0 0
    %367 = vmatpush1.bf16.msra.mxu0 0
    %368 = vmatprep.subr.bf16.mxu0 0
    %369 = vmatpush1.bf16.msra.mxu0 0
    %370 = vmatprep.subr.bf16.mxu0 0
    %371 = vmatpush1.bf16.msra.mxu0 0
    %372 = vmatprep.subr.bf16.mxu0 0
    %373 = vmatpush1.bf16.msra.mxu0 0
    %374 = vmatprep.subr.bf16.mxu0 0
    %375 = vmatpush1.bf16.msra.mxu0 0
    %376 = vmatprep.subr.bf16.mxu0 0
    %377 = vmatpush1.bf16.msra.mxu0 0
    %378 = vmatprep.subr.bf16.mxu0 0
    %379 = vmatpush1.bf16.msra.mxu0 0
    %380 = vmatprep.subr.bf16.mxu0 0
    %381 = vmatpush1.bf16.msra.mxu0 0
    %382 = vmatprep.subr.bf16.mxu0 0
    %383 = vmatpush1.bf16.msra.mxu0 0
    %384 = vmatprep.subr.bf16.mxu0 0
    %385 = vmatpush1.bf16.msra.mxu0 0
    %386 = vmatprep.subr.bf16.mxu0 0
    %387 = vmatpush1.bf16.msra.mxu0 0
    %388 = vmatprep.subr.bf16.mxu0 0
    %389 = vmatpush1.bf16.msra.mxu0 0
    %390 = vmatprep.mubr.bf16.mxu0 0
    %391 = vmatmul.mubr.bf16.gmra.mrb[0].mxu0 %v208
    %v392 = vpop.f32.mrb[0].mxu0
    %v393 = vadd.f32 %v133, %v392
    %v394 = vpop.f32.mrb[0].mxu0
    %v395 = vadd.f32 %v137, %v394
    %v396 = vpop.f32.mrb[0].mxu0
    %v397 = vpop.f32.mrb[0].mxu0
    %398 = vdwg.mxu0
    %v399 = vmax.f32 %v270, 0.0
    %v400 = vmax.f32 %v272, 0.0
    %v401 = vmax.f32 %v311, 0.0
    %v402 = vmax.f32 %v313, 0.0
    %v403 = vmax.f32 %v352, 0.0
    %v404 = vmax.f32 %v354, 0.0
    %v405 = vmax.f32 %v393, 0.0
    %v406 = vmax.f32 %v395, 0.0
    %v407 = vpack.c.bf16 %v399, %v399
    %v408 = vpack.c.bf16 %v400, %v400
    %v409 = vpack.c.bf16 %v401, %v401
    %v410 = vpack.c.bf16 %v402, %v402
    %v411 = vpack.c.bf16 %v403, %v403
    %v412 = vpack.c.bf16 %v404, %v404
    %v413 = vpack.c.bf16 %v405, %v405
    %v414 = vpack.c.bf16 %v406, %v406
    %v415 = vld [vmem:[#allocation4] sm:$0xff]
    %v416 = vld [vmem:[#allocation4 + $0x8] sm:$0xf]
    %v417 = vld [vmem:[#allocation4 + $0xc] sm:$0xff]
    %v418 = vld [vmem:[#allocation4 + $0x14] sm:$0xf]
    %v419 = vld [vmem:[#allocation4 + $0x18] sm:$0xff]
    %v420 = vld [vmem:[#allocation4 + $0x20] sm:$0xf]
    %v421 = vld [vmem:[#allocation4 + $0x24] sm:$0xff]
    %v422 = vld [vmem:[#allocation4 + $0x2c] sm:$0xf]
    %v423 = vld [vmem:[#allocation4 + $0x30] sm:$0xff]
    %v424 = vld [vmem:[#allocation4 + $0x38] sm:$0xf]
    %v425 = vld [vmem:[#allocation4 + $0x3c] sm:$0xff]
    %v426 = vld [vmem:[#allocation4 + $0x44] sm:$0xf]
    %v427 = vld [vmem:[#allocation4 + $0x48] sm:$0xff]
    %v428 = vld [vmem:[#allocation4 + $0x50] sm:$0xf]
    %v429 = vld [vmem:[#allocation4 + $0x54] sm:$0xff]
    %v430 = vld [vmem:[#allocation4 + $0x5c] sm:$0xf]
    %v431 = vld [vmem:[#allocation4 + $0x60] sm:$0xff]
    %v432 = vld [vmem:[#allocation4 + $0x68] sm:$0xf]
    %v433 = vld [vmem:[#allocation4 + $0x6c] sm:$0xff]
    %v434 = vld [vmem:[#allocation4 + $0x74] sm:$0xf]
    %v435 = vld [vmem:[#allocation4 + $0x78] sm:$0xff]
    %v436 = vld [vmem:[#allocation4 + $0x80] sm:$0xf]
    %v437 = vld [vmem:[#allocation4 + $0x84] sm:$0xff]
    %v438 = vld [vmem:[#allocation4 + $0x8c] sm:$0xf]
    %v439 = vld [vmem:[#allocation4 + $0x90] sm:$0xff]
    %v440 = vld [vmem:[#allocation4 + $0x98] sm:$0xf]
    %v441 = vld [vmem:[#allocation4 + $0x9c] sm:$0xff]
    %v442 = vld [vmem:[#allocation4 + $0xa4] sm:$0xf]
    %v443 = vld [vmem:[#allocation4 + $0xa8] sm:$0xff]
    %v444 = vld [vmem:[#allocation4 + $0xb0] sm:$0xf]
    %v445 = vld [vmem:[#allocation4 + $0xb4] sm:$0xff]
    %v446 = vld [vmem:[#allocation4 + $0xbc] sm:$0xf]
    %v447 = vld [vmem:[#allocation4 + $0xc0] sm:$0xff]
    %v448 = vld [vmem:[#allocation4 + $0xc8] sm:$0xf]
    %v449 = vld [vmem:[#allocation4 + $0xcc] sm:$0xff]
    %v450 = vld [vmem:[#allocation4 + $0xd4] sm:$0xf]
    %v451 = vld [vmem:[#allocation4 + $0xd8] sm:$0xff]
    %v452 = vld [vmem:[#allocation4 + $0xe0] sm:$0xf]
    %v453 = vld [vmem:[#allocation4 + $0xe4] sm:$0xff]
    %v454 = vld [vmem:[#allocation4 + $0xec] sm:$0xf]
    %v455 = vld [vmem:[#allocation4 + $0xf0] sm:$0xff]
    %v456 = vld [vmem:[#allocation4 + $0xf8] sm:$0xf]
    %v457 = vld [vmem:[#allocation4 + $0xfc] sm:$0xff]
    %v458 = vld [vmem:[#allocation4 + $0x104] sm:$0xf]
    %v459 = vld [vmem:[#allocation4 + $0x108] sm:$0xff]
    %v460 = vld [vmem:[#allocation4 + $0x110] sm:$0xf]
    %v461 = vld [vmem:[#allocation4 + $0x114] sm:$0xff]
    %v462 = vld [vmem:[#allocation4 + $0x11c] sm:$0xf]
    %v463 = vld [vmem:[#allocation4 + $0x120] sm:$0xff]
    %v464 = vld [vmem:[#allocation4 + $0x128] sm:$0xf]
    %v465 = vld [vmem:[#allocation4 + $0x12c] sm:$0xff]
    %v466 = vld [vmem:[#allocation4 + $0x134] sm:$0xf]
    %v467 = vld [vmem:[#allocation4 + $0x138] sm:$0xff]
    %v468 = vld [vmem:[#allocation4 + $0x140] sm:$0xf]
    %v469 = vld [vmem:[#allocation4 + $0x144] sm:$0xff]
    %v470 = vld [vmem:[#allocation4 + $0x14c] sm:$0xf]
    %v471 = vld [vmem:[#allocation4 + $0x150] sm:$0xff]
    %v472 = vld [vmem:[#allocation4 + $0x158] sm:$0xf]
    %v473 = vld [vmem:[#allocation4 + $0x15c] sm:$0xff]
    %v474 = vld [vmem:[#allocation4 + $0x164] sm:$0xf]
    %v475 = vld [vmem:[#allocation4 + $0x168] sm:$0xff]
    %v476 = vld [vmem:[#allocation4 + $0x170] sm:$0xf]
    %v477 = vld [vmem:[#allocation4 + $0x174] sm:$0xff]
    %v478 = vld [vmem:[#allocation4 + $0x17c] sm:$0xf]
    %v479 = vld [vmem:[#allocation4 + $0x180] sm:$0xff]
    %v480 = vld [vmem:[#allocation4 + $0x188] sm:$0xf]
    %v481 = vld [vmem:[#allocation4 + $0x18c] sm:$0xff]
    %v482 = vld [vmem:[#allocation4 + $0x194] sm:$0xf]
    %v483 = vld [vmem:[#allocation4 + $0x198] sm:$0xff]
    %v484 = vld [vmem:[#allocation4 + $0x1a0] sm:$0xf]
    %v485 = vld [vmem:[#allocation4 + $0x1a4] sm:$0xff]
    %v486 = vld [vmem:[#allocation4 + $0x1ac] sm:$0xf]
    %v487 = vld [vmem:[#allocation4 + $0x1b0] sm:$0xff]
    %v488 = vld [vmem:[#allocation4 + $0x1b8] sm:$0xf]
    %v489 = vld [vmem:[#allocation4 + $0x1bc] sm:$0xff]
    %v490 = vld [vmem:[#allocation4 + $0x1c4] sm:$0xf]
    %v491 = vld [vmem:[#allocation4 + $0x1c8] sm:$0xff]
    %v492 = vld [vmem:[#allocation4 + $0x1d0] sm:$0xf]
    %v493 = vld [vmem:[#allocation4 + $0x1d4] sm:$0xff]
    %v494 = vld [vmem:[#allocation4 + $0x1dc] sm:$0xf]
    %v495 = vld [vmem:[#allocation4 + $0x1e0] sm:$0xff]
    %v496 = vld [vmem:[#allocation4 + $0x1e8] sm:$0xf]
    %v497 = vld [vmem:[#allocation4 + $0x1ec] sm:$0xff]
    %v498 = vld [vmem:[#allocation4 + $0x1f4] sm:$0xf]
    %v499 = vld [vmem:[#allocation4 + $0x1f8] sm:$0xff]
    %v500 = vld [vmem:[#allocation4 + $0x200] sm:$0xf]
    %v501 = vld [vmem:[#allocation4 + $0x204] sm:$0xff]
    %v502 = vld [vmem:[#allocation4 + $0x20c] sm:$0xf]
    %v503 = vld [vmem:[#allocation4 + $0x210] sm:$0xff]
    %v504 = vld [vmem:[#allocation4 + $0x218] sm:$0xf]
    %v505 = vld [vmem:[#allocation4 + $0x21c] sm:$0xff]
    %v506 = vld [vmem:[#allocation4 + $0x224] sm:$0xf]
    %v507 = vld [vmem:[#allocation4 + $0x228] sm:$0xff]
    %v508 = vld [vmem:[#allocation4 + $0x230] sm:$0xf]
    %v509 = vld [vmem:[#allocation4 + $0x234] sm:$0xff]
    %v510 = vld [vmem:[#allocation4 + $0x23c] sm:$0xf]
    %v511 = vld [vmem:[#allocation4 + $0x240] sm:$0xff]
    %v512 = vld [vmem:[#allocation4 + $0x248] sm:$0xf]
    %v513 = vld [vmem:[#allocation4 + $0x24c] sm:$0xff]
    %v514 = vld [vmem:[#allocation4 + $0x254] sm:$0xf]
    %v515 = vld [vmem:[#allocation4 + $0x258] sm:$0xff]
    %v516 = vld [vmem:[#allocation4 + $0x260] sm:$0xf]
    %v517 = vld [vmem:[#allocation4 + $0x264] sm:$0xff]
    %v518 = vld [vmem:[#allocation4 + $0x26c] sm:$0xf]
    %v519 = vld [vmem:[#allocation4 + $0x270] sm:$0xff]
    %v520 = vld [vmem:[#allocation4 + $0x278] sm:$0xf]
    %v521 = vld [vmem:[#allocation4 + $0x27c] sm:$0xff]
    %v522 = vld [vmem:[#allocation4 + $0x284] sm:$0xf]
    %v523 = vld [vmem:[#allocation4 + $0x288] sm:$0xff]
    %v524 = vld [vmem:[#allocation4 + $0x290] sm:$0xf]
    %v525 = vld [vmem:[#allocation4 + $0x294] sm:$0xff]
    %v526 = vld [vmem:[#allocation4 + $0x29c] sm:$0xf]
    %v527 = vld [vmem:[#allocation4 + $0x2a0] sm:$0xff]
    %v528 = vld [vmem:[#allocation4 + $0x2a8] sm:$0xf]
    %v529 = vld [vmem:[#allocation4 + $0x2ac] sm:$0xff]
    %v530 = vld [vmem:[#allocation4 + $0x2b4] sm:$0xf]
    %v531 = vld [vmem:[#allocation4 + $0x2b8] sm:$0xff]
    %v532 = vld [vmem:[#allocation4 + $0x2c0] sm:$0xf]
    %v533 = vld [vmem:[#allocation4 + $0x2c4] sm:$0xff]
    %v534 = vld [vmem:[#allocation4 + $0x2cc] sm:$0xf]
    %v535 = vld [vmem:[#allocation4 + $0x2d0] sm:$0xff]
    %v536 = vld [vmem:[#allocation4 + $0x2d8] sm:$0xf]
    %v537 = vld [vmem:[#allocation4 + $0x2dc] sm:$0xff]
    %v538 = vld [vmem:[#allocation4 + $0x2e4] sm:$0xf]
    %v539 = vld [vmem:[#allocation4 + $0x2e8] sm:$0xff]
    %v540 = vld [vmem:[#allocation4 + $0x2f0] sm:$0xf]
    %v541 = vld [vmem:[#allocation4 + $0x2f4] sm:$0xff]
    %v542 = vld [vmem:[#allocation4 + $0x2fc] sm:$0xf]
    %v543 = vld [vmem:[%s4] sm:$0x7]
    %v545 = vlaneseq
    %v546 = vshrl.u32 %v545, 7
    %v547 = vsub.s32 0, %v546
    %v548 = vrot.slane %v543, %v547
    %v549 = vlaneseq
    %v550 = vshrl.u32 %v549, 7
    %v551 = vsub.s32 1, %v550
    %v552 = vrot.slane %v543, %v551
    %v553 = vlaneseq
    %v554 = vshrl.u32 %v553, 7
    %v555 = vsub.s32 2, %v554
    %v556 = vrot.slane %v543, %v555
    %v688 = vunpack.c.l.b16 %v415
    %v689 = vunpack.c.h.b16 %v415
    %v690 = vunpack.c.l.b16 %v416
    %v691 = vunpack.c.l.b16 %v417
    %v692 = vunpack.c.h.b16 %v417
    %v693 = vunpack.c.l.b16 %v418
    %v694 = vunpack.c.l.b16 %v419
    %v695 = vunpack.c.h.b16 %v419
    %v696 = vunpack.c.l.b16 %v420
    %v697 = vunpack.c.l.b16 %v421
    %v698 = vunpack.c.h.b16 %v421
    %v699 = vunpack.c.l.b16 %v422
    %v700 = vunpack.c.l.b16 %v423
    %v701 = vunpack.c.h.b16 %v423
    %v702 = vunpack.c.l.b16 %v424
    %v703 = vunpack.c.l.b16 %v425
    %v704 = vunpack.c.h.b16 %v425
    %v705 = vunpack.c.l.b16 %v426
    %v706 = vunpack.c.l.b16 %v427
    %v707 = vunpack.c.h.b16 %v427
    %v708 = vunpack.c.l.b16 %v428
    %v709 = vunpack.c.l.b16 %v429
    %v710 = vunpack.c.h.b16 %v429
    %v711 = vunpack.c.l.b16 %v430
    %v712 = vunpack.c.l.b16 %v431
    %v713 = vunpack.c.h.b16 %v431
    %v714 = vunpack.c.l.b16 %v432
    %v715 = vunpack.c.l.b16 %v433
    %v716 = vunpack.c.h.b16 %v433
    %v717 = vunpack.c.l.b16 %v434
    %v718 = vunpack.c.l.b16 %v435
    %v719 = vunpack.c.h.b16 %v435
    %v720 = vunpack.c.l.b16 %v436
    %v721 = vunpack.c.l.b16 %v437
    %v722 = vunpack.c.h.b16 %v437
    %v723 = vunpack.c.l.b16 %v438
    %v724 = vunpack.c.l.b16 %v439
    %v725 = vunpack.c.h.b16 %v439
    %v726 = vunpack.c.l.b16 %v440
    %v727 = vunpack.c.l.b16 %v441
    %v728 = vunpack.c.h.b16 %v441
    %v729 = vunpack.c.l.b16 %v442
    %v730 = vunpack.c.l.b16 %v443
    %v731 = vunpack.c.h.b16 %v443
    %v732 = vunpack.c.l.b16 %v444
    %v733 = vunpack.c.l.b16 %v445
    %v734 = vunpack.c.h.b16 %v445
    %v735 = vunpack.c.l.b16 %v446
    %v736 = vunpack.c.l.b16 %v447
    %v737 = vunpack.c.h.b16 %v447
    %v738 = vunpack.c.l.b16 %v448
    %v739 = vunpack.c.l.b16 %v449
    %v740 = vunpack.c.h.b16 %v449
    %v741 = vunpack.c.l.b16 %v450
    %v742 = vunpack.c.l.b16 %v451
    %v743 = vunpack.c.h.b16 %v451
    %v744 = vunpack.c.l.b16 %v452
    %v745 = vunpack.c.l.b16 %v453
    %v746 = vunpack.c.h.b16 %v453
    %v747 = vunpack.c.l.b16 %v454
    %v748 = vunpack.c.l.b16 %v455
    %v749 = vunpack.c.h.b16 %v455
    %v750 = vunpack.c.l.b16 %v456
    %v751 = vunpack.c.l.b16 %v457
    %v752 = vunpack.c.h.b16 %v457
    %v753 = vunpack.c.l.b16 %v458
    %v754 = vunpack.c.l.b16 %v459
    %v755 = vunpack.c.h.b16 %v459
    %v756 = vunpack.c.l.b16 %v460
    %v757 = vunpack.c.l.b16 %v461
    %v758 = vunpack.c.h.b16 %v461
    %v759 = vunpack.c.l.b16 %v462
    %v760 = vunpack.c.l.b16 %v463
    %v761 = vunpack.c.h.b16 %v463
    %v762 = vunpack.c.l.b16 %v464
    %v763 = vunpack.c.l.b16 %v465
    %v764 = vunpack.c.h.b16 %v465
    %v765 = vunpack.c.l.b16 %v466
    %v766 = vunpack.c.l.b16 %v467
    %v767 = vunpack.c.h.b16 %v467
    %v768 = vunpack.c.l.b16 %v468
    %v769 = vunpack.c.l.b16 %v469
    %v770 = vunpack.c.h.b16 %v469
    %v771 = vunpack.c.l.b16 %v470
    %v772 = vunpack.c.l.b16 %v471
    %v773 = vunpack.c.h.b16 %v471
    %v774 = vunpack.c.l.b16 %v472
    %v775 = vunpack.c.l.b16 %v473
    %v776 = vunpack.c.h.b16 %v473
    %v777 = vunpack.c.l.b16 %v474
    %v778 = vunpack.c.l.b16 %v475
    %v779 = vunpack.c.h.b16 %v475
    %v780 = vunpack.c.l.b16 %v476
    %v781 = vunpack.c.l.b16 %v477
    %v782 = vunpack.c.h.b16 %v477
    %v783 = vunpack.c.l.b16 %v478
    %v784 = vunpack.c.l.b16 %v479
    %v785 = vunpack.c.h.b16 %v479
    %v786 = vunpack.c.l.b16 %v480
    %v787 = vunpack.c.l.b16 %v481
    %v788 = vunpack.c.h.b16 %v481
    %v789 = vunpack.c.l.b16 %v482
    %v790 = vunpack.c.l.b16 %v483
    %v791 = vunpack.c.h.b16 %v483
    %v792 = vunpack.c.l.b16 %v484
    %v793 = vunpack.c.l.b16 %v485
    %v794 = vunpack.c.h.b16 %v485
    %v795 = vunpack.c.l.b16 %v486
    %v796 = vunpack.c.l.b16 %v487
    %v797 = vunpack.c.h.b16 %v487
    %v798 = vunpack.c.l.b16 %v488
    %v799 = vunpack.c.l.b16 %v489
    %v800 = vunpack.c.h.b16 %v489
    %v801 = vunpack.c.l.b16 %v490
    %v802 = vunpack.c.l.b16 %v491
    %v803 = vunpack.c.h.b16 %v491
    %v804 = vunpack.c.l.b16 %v492
    %v805 = vunpack.c.l.b16 %v493
    %v806 = vunpack.c.h.b16 %v493
    %v807 = vunpack.c.l.b16 %v494
    %v808 = vunpack.c.l.b16 %v495
    %v809 = vunpack.c.h.b16 %v495
    %v810 = vunpack.c.l.b16 %v496
    %v811 = vunpack.c.l.b16 %v497
    %v812 = vunpack.c.h.b16 %v497
    %v813 = vunpack.c.l.b16 %v498
    %v814 = vunpack.c.l.b16 %v499
    %v815 = vunpack.c.h.b16 %v499
    %v816 = vunpack.c.l.b16 %v500
    %v817 = vunpack.c.l.b16 %v501
    %v818 = vunpack.c.h.b16 %v501
    %v819 = vunpack.c.l.b16 %v502
    %v820 = vunpack.c.l.b16 %v503
    %v821 = vunpack.c.h.b16 %v503
    %v822 = vunpack.c.l.b16 %v504
    %v823 = vunpack.c.l.b16 %v505
    %v824 = vunpack.c.h.b16 %v505
    %v825 = vunpack.c.l.b16 %v506
    %v826 = vunpack.c.l.b16 %v507
    %v827 = vunpack.c.h.b16 %v507
    %v828 = vunpack.c.l.b16 %v508
    %v829 = vunpack.c.l.b16 %v509
    %v830 = vunpack.c.h.b16 %v509
    %v831 = vunpack.c.l.b16 %v510
    %v832 = vunpack.c.l.b16 %v511
    %v833 = vunpack.c.h.b16 %v511
    %v834 = vunpack.c.l.b16 %v512
    %v835 = vunpack.c.l.b16 %v513
    %v836 = vunpack.c.h.b16 %v513
    %v837 = vunpack.c.l.b16 %v514
    %v838 = vunpack.c.l.b16 %v515
    %v839 = vunpack.c.h.b16 %v515
    %v840 = vunpack.c.l.b16 %v516
    %v841 = vunpack.c.l.b16 %v517
    %v842 = vunpack.c.h.b16 %v517
    %v843 = vunpack.c.l.b16 %v518
    %v844 = vunpack.c.l.b16 %v519
    %v845 = vunpack.c.h.b16 %v519
    %v846 = vunpack.c.l.b16 %v520
    %v847 = vunpack.c.l.b16 %v521
    %v848 = vunpack.c.h.b16 %v521
    %v849 = vunpack.c.l.b16 %v522
    %v850 = vunpack.c.l.b16 %v523
    %v851 = vunpack.c.h.b16 %v523
    %v852 = vunpack.c.l.b16 %v524
    %v853 = vunpack.c.l.b16 %v525
    %v854 = vunpack.c.h.b16 %v525
    %v855 = vunpack.c.l.b16 %v526
    %v856 = vunpack.c.l.b16 %v527
    %v857 = vunpack.c.h.b16 %v527
    %v858 = vunpack.c.l.b16 %v528
    %v859 = vunpack.c.l.b16 %v529
    %v860 = vunpack.c.h.b16 %v529
    %v861 = vunpack.c.l.b16 %v530
    %v862 = vunpack.c.l.b16 %v531
    %v863 = vunpack.c.h.b16 %v531
    %v864 = vunpack.c.l.b16 %v532
    %v865 = vunpack.c.l.b16 %v533
    %v866 = vunpack.c.h.b16 %v533
    %v867 = vunpack.c.l.b16 %v534
    %v868 = vunpack.c.l.b16 %v535
    %v869 = vunpack.c.h.b16 %v535
    %v870 = vunpack.c.l.b16 %v536
    %v871 = vunpack.c.l.b16 %v537
    %v872 = vunpack.c.h.b16 %v537
    %v873 = vunpack.c.l.b16 %v538
    %v874 = vunpack.c.l.b16 %v539
    %v875 = vunpack.c.h.b16 %v539
    %v876 = vunpack.c.l.b16 %v540
    %v877 = vunpack.c.l.b16 %v541
    %v878 = vunpack.c.h.b16 %v541
    %v879 = vunpack.c.l.b16 %v542
    %v880 = vpack.c.b16 %v691, %v688
    %v881 = vpack.c.b16 %v692, %v689
    %v882 = vpack.c.b16 %v693, %v690
    %v883 = vpack.c.b16 %v697, %v694
    %v884 = vpack.c.b16 %v698, %v695
    %v885 = vpack.c.b16 %v699, %v696
    %v886 = vpack.c.b16 %v703, %v700
    %v887 = vpack.c.b16 %v704, %v701
    %v888 = vpack.c.b16 %v705, %v702
    %v889 = vpack.c.b16 %v709, %v706
    %v890 = vpack.c.b16 %v710, %v707
    %v891 = vpack.c.b16 %v711, %v708
    %v892 = vpack.c.b16 %v715, %v712
    %v893 = vpack.c.b16 %v716, %v713
    %v894 = vpack.c.b16 %v717, %v714
    %v895 = vpack.c.b16 %v721, %v718
    %v896 = vpack.c.b16 %v722, %v719
    %v897 = vpack.c.b16 %v723, %v720
    %v898 = vpack.c.b16 %v727, %v724
    %v899 = vpack.c.b16 %v728, %v725
    %v900 = vpack.c.b16 %v729, %v726
    %v901 = vpack.c.b16 %v733, %v730
    %v902 = vpack.c.b16 %v734, %v731
    %v903 = vpack.c.b16 %v735, %v732
    %v904 = vpack.c.b16 %v739, %v736
    %v905 = vpack.c.b16 %v740, %v737
    %v906 = vpack.c.b16 %v741, %v738
    %v907 = vpack.c.b16 %v745, %v742
    %v908 = vpack.c.b16 %v746, %v743
    %v909 = vpack.c.b16 %v747, %v744
    %v910 = vpack.c.b16 %v751, %v748
    %v911 = vpack.c.b16 %v752, %v749
    %v912 = vpack.c.b16 %v753, %v750
    %v913 = vpack.c.b16 %v757, %v754
    %v914 = vpack.c.b16 %v758, %v755
    %v915 = vpack.c.b16 %v759, %v756
    %v916 = vpack.c.b16 %v763, %v760
    %v917 = vpack.c.b16 %v764, %v761
    %v918 = vpack.c.b16 %v765, %v762
    %v919 = vpack.c.b16 %v769, %v766
    %v920 = vpack.c.b16 %v770, %v767
    %v921 = vpack.c.b16 %v771, %v768
    %v922 = vpack.c.b16 %v775, %v772
    %v923 = vpack.c.b16 %v776, %v773
    %v924 = vpack.c.b16 %v777, %v774
    %v925 = vpack.c.b16 %v781, %v778
    %v926 = vpack.c.b16 %v782, %v779
    %v927 = vpack.c.b16 %v783, %v780
    %v928 = vpack.c.b16 %v787, %v784
    %v929 = vpack.c.b16 %v788, %v785
    %v930 = vpack.c.b16 %v789, %v786
    %v931 = vpack.c.b16 %v793, %v790
    %v932 = vpack.c.b16 %v794, %v791
    %v933 = vpack.c.b16 %v795, %v792
    %v934 = vpack.c.b16 %v799, %v796
    %v935 = vpack.c.b16 %v800, %v797
    %v936 = vpack.c.b16 %v801, %v798
    %v937 = vpack.c.b16 %v805, %v802
    %v938 = vpack.c.b16 %v806, %v803
    %v939 = vpack.c.b16 %v807, %v804
    %v940 = vpack.c.b16 %v811, %v808
    %v941 = vpack.c.b16 %v812, %v809
    %v942 = vpack.c.b16 %v813, %v810
    %v943 = vpack.c.b16 %v817, %v814
    %v944 = vpack.c.b16 %v818, %v815
    %v945 = vpack.c.b16 %v819, %v816
    %v946 = vpack.c.b16 %v823, %v820
    %v947 = vpack.c.b16 %v824, %v821
    %v948 = vpack.c.b16 %v825, %v822
    %v949 = vpack.c.b16 %v829, %v826
    %v950 = vpack.c.b16 %v830, %v827
    %v951 = vpack.c.b16 %v831, %v828
    %v952 = vpack.c.b16 %v835, %v832
    %v953 = vpack.c.b16 %v836, %v833
    %v954 = vpack.c.b16 %v837, %v834
    %v955 = vpack.c.b16 %v841, %v838
    %v956 = vpack.c.b16 %v842, %v839
    %v957 = vpack.c.b16 %v843, %v840
    %v958 = vpack.c.b16 %v847, %v844
    %v959 = vpack.c.b16 %v848, %v845
    %v960 = vpack.c.b16 %v849, %v846
    %v961 = vpack.c.b16 %v853, %v850
    %v962 = vpack.c.b16 %v854, %v851
    %v963 = vpack.c.b16 %v855, %v852
    %v964 = vpack.c.b16 %v859, %v856
    %v965 = vpack.c.b16 %v860, %v857
    %v966 = vpack.c.b16 %v861, %v858
    %v967 = vpack.c.b16 %v865, %v862
    %v968 = vpack.c.b16 %v866, %v863
    %v969 = vpack.c.b16 %v867, %v864
    %v970 = vpack.c.b16 %v871, %v868
    %v971 = vpack.c.b16 %v872, %v869
    %v972 = vpack.c.b16 %v873, %v870
    %v973 = vpack.c.b16 %v877, %v874
    %v974 = vpack.c.b16 %v878, %v875
    %v975 = vpack.c.b16 %v879, %v876
    %1072 = vmatprep.subr.bf16.mxu0 %v881
    %1073 = vmatpush1.bf16.msra.mxu0 %v880
    %1074 = vmatprep.subr.bf16.mxu0 %v884
    %1075 = vmatpush1.bf16.msra.mxu0 %v883
    %1076 = vmatprep.subr.bf16.mxu0 %v887
    %1077 = vmatpush1.bf16.msra.mxu0 %v886
    %1078 = vmatprep.subr.bf16.mxu0 %v890
    %1079 = vmatpush1.bf16.msra.mxu0 %v889
    %1080 = vmatprep.subr.bf16.mxu0 %v893
    %1081 = vmatpush1.bf16.msra.mxu0 %v892
    %1082 = vmatprep.subr.bf16.mxu0 %v896
    %1083 = vmatpush1.bf16.msra.mxu0 %v895
    %1084 = vmatprep.subr.bf16.mxu0 %v899
    %1085 = vmatpush1.bf16.msra.mxu0 %v898
    %1086 = vmatprep.subr.bf16.mxu0 %v902
    %1087 = vmatpush1.bf16.msra.mxu0 %v901
    %1088 = vmatprep.subr.bf16.mxu0 %v905
    %1089 = vmatpush1.bf16.msra.mxu0 %v904
    %1090 = vmatprep.subr.bf16.mxu0 %v908
    %1091 = vmatpush1.bf16.msra.mxu0 %v907
    %1092 = vmatprep.subr.bf16.mxu0 %v911
    %1093 = vmatpush1.bf16.msra.mxu0 %v910
    %1094 = vmatprep.subr.bf16.mxu0 %v914
    %1095 = vmatpush1.bf16.msra.mxu0 %v913
    %1096 = vmatprep.subr.bf16.mxu0 %v917
    %1097 = vmatpush1.bf16.msra.mxu0 %v916
    %1098 = vmatprep.subr.bf16.mxu0 %v920
    %1099 = vmatpush1.bf16.msra.mxu0 %v919
    %1100 = vmatprep.subr.bf16.mxu0 %v923
    %1101 = vmatpush1.bf16.msra.mxu0 %v922
    %1102 = vmatprep.subr.bf16.mxu0 %v926
    %1103 = vmatpush1.bf16.msra.mxu0 %v925
    %1104 = vmatprep.mubr.bf16.mxu0 %v408
    %1105 = vmatmul.mubr.bf16.gmra.mrb[0].mxu0 %v407
    %v1106 = vpop.f32.mrb[0].mxu0
    %v1107 = vadd.f32 %v548, %v1106
    %v1108 = vpop.f32.mrb[0].mxu0
    %v1109 = vadd.f32 %v552, %v1108
    %v1110 = vpop.f32.mrb[0].mxu0
    %v1111 = vpop.f32.mrb[0].mxu0
    %1112 = vdwg.mxu0
    %1113 = vmatprep.subr.bf16.mxu0 %v929
    %1114 = vmatpush1.bf16.msra.mxu0 %v928
    %1115 = vmatprep.subr.bf16.mxu0 %v932
    %1116 = vmatpush1.bf16.msra.mxu0 %v931
    %1117 = vmatprep.subr.bf16.mxu0 %v935
    %1118 = vmatpush1.bf16.msra.mxu0 %v934
    %1119 = vmatprep.subr.bf16.mxu0 %v938
    %1120 = vmatpush1.bf16.msra.mxu0 %v937
    %1121 = vmatprep.subr.bf16.mxu0 %v941
    %1122 = vmatpush1.bf16.msra.mxu0 %v940
    %1123 = vmatprep.subr.bf16.mxu0 %v944
    %1124 = vmatpush1.bf16.msra.mxu0 %v943
    %1125 = vmatprep.subr.bf16.mxu0 %v947
    %1126 = vmatpush1.bf16.msra.mxu0 %v946
    %1127 = vmatprep.subr.bf16.mxu0 %v950
    %1128 = vmatpush1.bf16.msra.mxu0 %v949
    %1129 = vmatprep.subr.bf16.mxu0 %v953
    %1130 = vmatpush1.bf16.msra.mxu0 %v952
    %1131 = vmatprep.subr.bf16.mxu0 %v956
    %1132 = vmatpush1.bf16.msra.mxu0 %v955
    %1133 = vmatprep.subr.bf16.mxu0 %v959
    %1134 = vmatpush1.bf16.msra.mxu0 %v958
    %1135 = vmatprep.subr.bf16.mxu0 %v962
    %1136 = vmatpush1.bf16.msra.mxu0 %v961
    %1137 = vmatprep.subr.bf16.mxu0 %v965
    %1138 = vmatpush1.bf16.msra.mxu0 %v964
    %1139 = vmatprep.subr.bf16.mxu0 %v968
    %1140 = vmatpush1.bf16.msra.mxu0 %v967
    %1141 = vmatprep.subr.bf16.mxu0 %v971
    %1142 = vmatpush1.bf16.msra.mxu0 %v970
    %1143 = vmatprep.subr.bf16.mxu0 %v974
    %1144 = vmatpush1.bf16.msra.mxu0 %v973
    %1145 = vmatprep.mubr.bf16.mxu0 %v410
    %1146 = vmatmul.mubr.bf16.gmra.mrb[0].mxu0 %v409
    %v1147 = vpop.f32.mrb[0].mxu0
    %v1148 = vadd.f32 %v1107, %v1147
    %v1149 = vpop.f32.mrb[0].mxu0
    %v1150 = vadd.f32 %v1109, %v1149
    %v1151 = vpop.f32.mrb[0].mxu0
    %v1152 = vpop.f32.mrb[0].mxu0
    %1153 = vdwg.mxu0
    %1154 = vmatprep.subr.bf16.mxu0 0
    %1155 = vmatpush1.bf16.msra.mxu0 %v882
    %1156 = vmatprep.subr.bf16.mxu0 0
    %1157 = vmatpush1.bf16.msra.mxu0 %v885
    %1158 = vmatprep.subr.bf16.mxu0 0
    %1159 = vmatpush1.bf16.msra.mxu0 %v888
    %1160 = vmatprep.subr.bf16.mxu0 0
    %1161 = vmatpush1.bf16.msra.mxu0 %v891
    %1162 = vmatprep.subr.bf16.mxu0 0
    %1163 = vmatpush1.bf16.msra.mxu0 %v894
    %1164 = vmatprep.subr.bf16.mxu0 0
    %1165 = vmatpush1.bf16.msra.mxu0 %v897
    %1166 = vmatprep.subr.bf16.mxu0 0
    %1167 = vmatpush1.bf16.msra.mxu0 %v900
    %1168 = vmatprep.subr.bf16.mxu0 0
    %1169 = vmatpush1.bf16.msra.mxu0 %v903
    %1170 = vmatprep.subr.bf16.mxu0 0
    %1171 = vmatpush1.bf16.msra.mxu0 %v906
    %1172 = vmatprep.subr.bf16.mxu0 0
    %1173 = vmatpush1.bf16.msra.mxu0 %v909
    %1174 = vmatprep.subr.bf16.mxu0 0
    %1175 = vmatpush1.bf16.msra.mxu0 %v912
    %1176 = vmatprep.subr.bf16.mxu0 0
    %1177 = vmatpush1.bf16.msra.mxu0 %v915
    %1178 = vmatprep.subr.bf16.mxu0 0
    %1179 = vmatpush1.bf16.msra.mxu0 %v918
    %1180 = vmatprep.subr.bf16.mxu0 0
    %1181 = vmatpush1.bf16.msra.mxu0 %v921
    %1182 = vmatprep.subr.bf16.mxu0 0
    %1183 = vmatpush1.bf16.msra.mxu0 %v924
    %1184 = vmatprep.subr.bf16.mxu0 0
    %1185 = vmatpush1.bf16.msra.mxu0 %v927
    %1186 = vmatprep.mubr.bf16.mxu0 %v408
    %1187 = vmatmul.mubr.bf16.gmra.mrb[0].mxu0 %v407
    %v1188 = vpop.f32.mrb[0].mxu0
    %v1189 = vadd.f32 %v556, %v1188
    %v1190 = vpop.f32.mrb[0].mxu0
    %v1191 = vpop.f32.mrb[0].mxu0
    %v1192 = vpop.f32.mrb[0].mxu0
    %1193 = vdwg.mxu0
    %1194 = vmatprep.subr.bf16.mxu0 0
    %1195 = vmatpush1.bf16.msra.mxu0 %v930
    %1196 = vmatprep.subr.bf16.mxu0 0
    %1197 = vmatpush1.bf16.msra.mxu0 %v933
    %1198 = vmatprep.subr.bf16.mxu0 0
    %1199 = vmatpush1.bf16.msra.mxu0 %v936
    %1200 = vmatprep.subr.bf16.mxu0 0
    %1201 = vmatpush1.bf16.msra.mxu0 %v939
    %1202 = vmatprep.subr.bf16.mxu0 0
    %1203 = vmatpush1.bf16.msra.mxu0 %v942
    %1204 = vmatprep.subr.bf16.mxu0 0
    %1205 = vmatpush1.bf16.msra.mxu0 %v945
    %1206 = vmatprep.subr.bf16.mxu0 0
    %1207 = vmatpush1.bf16.msra.mxu0 %v948
    %1208 = vmatprep.subr.bf16.mxu0 0
    %1209 = vmatpush1.bf16.msra.mxu0 %v951
    %1210 = vmatprep.subr.bf16.mxu0 0
    %1211 = vmatpush1.bf16.msra.mxu0 %v954
    %1212 = vmatprep.subr.bf16.mxu0 0
    %1213 = vmatpush1.bf16.msra.mxu0 %v957
    %1214 = vmatprep.subr.bf16.mxu0 0
    %1215 = vmatpush1.bf16.msra.mxu0 %v960
    %1216 = vmatprep.subr.bf16.mxu0 0
    %1217 = vmatpush1.bf16.msra.mxu0 %v963
    %1218 = vmatprep.subr.bf16.mxu0 0
    %1219 = vmatpush1.bf16.msra.mxu0 %v966
    %1220 = vmatprep.subr.bf16.mxu0 0
    %1221 = vmatpush1.bf16.msra.mxu0 %v969
    %1222 = vmatprep.subr.bf16.mxu0 0
    %1223 = vmatpush1.bf16.msra.mxu0 %v972
    %1224 = vmatprep.subr.bf16.mxu0 0
    %1225 = vmatpush1.bf16.msra.mxu0 %v975
    %1226 = vmatprep.mubr.bf16.mxu0 %v410
    %1227 = vmatmul.mubr.bf16.gmra.mrb[0].mxu0 %v409
    %v1228 = vpop.f32.mrb[0].mxu0
    %v1229 = vadd.f32 %v1189, %v1228
    %v1230 = vpop.f32.mrb[0].mxu0
    %v1231 = vpop.f32.mrb[0].mxu0
    %v1232 = vpop.f32.mrb[0].mxu0
    %1233 = vdwg.mxu0
    %v1234 = vmax.f32 %v1148, 0.0
    %v1235 = vmax.f32 %v1150, 0.0
    %v1236 = vmax.f32 %v1229, 0.0
    %v1237 = vld [vmem:[#allocation6] sm:$0xff]
    %v1238 = vld [vmem:[#allocation6 + $0x8] sm:$0xf]
    %v1239 = vld [vmem:[#allocation6 + $0xc] sm:$0xff]
    %v1240 = vld [vmem:[#allocation6 + $0x14] sm:$0xf]
    %v1241 = vld [vmem:[#allocation6 + $0x18] sm:$0xff]
    %v1242 = vld [vmem:[#allocation6 + $0x20] sm:$0xf]
    %v1243 = vld [vmem:[#allocation6 + $0x24] sm:$0xff]
    %v1244 = vld [vmem:[#allocation6 + $0x2c] sm:$0xf]
    %v1245 = vld [vmem:[#allocation6 + $0x30] sm:$0xff]
    %v1246 = vld [vmem:[#allocation6 + $0x38] sm:$0xf]
    %v1247 = vld [vmem:[#allocation6 + $0x3c] sm:$0xff]
    %v1248 = vld [vmem:[#allocation6 + $0x44] sm:$0xf]
    %v1249 = vld [vmem:[#allocation6 + $0x48] sm:$0xff]
    %v1250 = vld [vmem:[#allocation6 + $0x50] sm:$0xf]
    %v1251 = vld [vmem:[#allocation6 + $0x54] sm:$0xff]
    %v1252 = vld [vmem:[#allocation6 + $0x5c] sm:$0xf]
    %v1253 = vld [vmem:[#allocation6 + $0x60] sm:$0xff]
    %v1254 = vld [vmem:[#allocation6 + $0x68] sm:$0xf]
    %v1255 = vld [vmem:[#allocation6 + $0x6c] sm:$0xff]
    %v1256 = vld [vmem:[#allocation6 + $0x74] sm:$0xf]
    %v1257 = vld [vmem:[#allocation6 + $0x78] sm:$0xff]
    %v1258 = vld [vmem:[#allocation6 + $0x80] sm:$0xf]
    %v1259 = vld [vmem:[#allocation6 + $0x84] sm:$0xff]
    %v1260 = vld [vmem:[#allocation6 + $0x8c] sm:$0xf]
    %v1261 = vld [vmem:[#allocation6 + $0x90] sm:$0xff]
    %v1262 = vld [vmem:[#allocation6 + $0x98] sm:$0xf]
    %v1263 = vld [vmem:[#allocation6 + $0x9c] sm:$0xff]
    %v1264 = vld [vmem:[#allocation6 + $0xa4] sm:$0xf]
    %v1265 = vld [vmem:[#allocation6 + $0xa8] sm:$0xff]
    %v1266 = vld [vmem:[#allocation6 + $0xb0] sm:$0xf]
    %v1267 = vld [vmem:[#allocation6 + $0xb4] sm:$0xff]
    %v1268 = vld [vmem:[#allocation6 + $0xbc] sm:$0xf]
    %v1269 = vld [vmem:[#allocation6 + $0xc0] sm:$0xff]
    %v1270 = vld [vmem:[#allocation6 + $0xc8] sm:$0xf]
    %v1271 = vld [vmem:[#allocation6 + $0xcc] sm:$0xff]
    %v1272 = vld [vmem:[#allocation6 + $0xd4] sm:$0xf]
    %v1273 = vld [vmem:[#allocation6 + $0xd8] sm:$0xff]
    %v1274 = vld [vmem:[#allocation6 + $0xe0] sm:$0xf]
    %v1275 = vld [vmem:[#allocation6 + $0xe4] sm:$0xff]
    %v1276 = vld [vmem:[#allocation6 + $0xec] sm:$0xf]
    %v1277 = vld [vmem:[#allocation6 + $0xf0] sm:$0xff]
    %v1278 = vld [vmem:[#allocation6 + $0xf8] sm:$0xf]
    %v1279 = vld [vmem:[#allocation6 + $0xfc] sm:$0xff]
    %v1280 = vld [vmem:[#allocation6 + $0x104] sm:$0xf]
    %v1281 = vld [vmem:[#allocation6 + $0x108] sm:$0xff]
    %v1282 = vld [vmem:[#allocation6 + $0x110] sm:$0xf]
    %v1283 = vld [vmem:[#allocation6 + $0x114] sm:$0xff]
    %v1284 = vld [vmem:[#allocation6 + $0x11c] sm:$0xf]
    %v1285 = vld [vmem:[#allocation6 + $0x120] sm:$0xff]
    %v1286 = vld [vmem:[#allocation6 + $0x128] sm:$0xf]
    %v1287 = vld [vmem:[#allocation6 + $0x12c] sm:$0xff]
    %v1288 = vld [vmem:[#allocation6 + $0x134] sm:$0xf]
    %v1289 = vld [vmem:[#allocation6 + $0x138] sm:$0xff]
    %v1290 = vld [vmem:[#allocation6 + $0x140] sm:$0xf]
    %v1291 = vld [vmem:[#allocation6 + $0x144] sm:$0xff]
    %v1292 = vld [vmem:[#allocation6 + $0x14c] sm:$0xf]
    %v1293 = vld [vmem:[#allocation6 + $0x150] sm:$0xff]
    %v1294 = vld [vmem:[#allocation6 + $0x158] sm:$0xf]
    %v1295 = vld [vmem:[#allocation6 + $0x15c] sm:$0xff]
    %v1296 = vld [vmem:[#allocation6 + $0x164] sm:$0xf]
    %v1297 = vld [vmem:[#allocation6 + $0x168] sm:$0xff]
    %v1298 = vld [vmem:[#allocation6 + $0x170] sm:$0xf]
    %v1299 = vld [vmem:[#allocation6 + $0x174] sm:$0xff]
    %v1300 = vld [vmem:[#allocation6 + $0x17c] sm:$0xf]
    %v1301 = vld [vmem:[#allocation6 + $0x180] sm:$0xff]
    %v1302 = vld [vmem:[#allocation6 + $0x188] sm:$0xf]
    %v1303 = vld [vmem:[#allocation6 + $0x18c] sm:$0xff]
    %v1304 = vld [vmem:[#allocation6 + $0x194] sm:$0xf]
    %v1305 = vld [vmem:[#allocation6 + $0x198] sm:$0xff]
    %v1306 = vld [vmem:[#allocation6 + $0x1a0] sm:$0xf]
    %v1307 = vld [vmem:[#allocation6 + $0x1a4] sm:$0xff]
    %v1308 = vld [vmem:[#allocation6 + $0x1ac] sm:$0xf]
    %v1309 = vld [vmem:[#allocation6 + $0x1b0] sm:$0xff]
    %v1310 = vld [vmem:[#allocation6 + $0x1b8] sm:$0xf]
    %v1311 = vld [vmem:[#allocation6 + $0x1bc] sm:$0xff]
    %v1312 = vld [vmem:[#allocation6 + $0x1c4] sm:$0xf]
    %v1313 = vld [vmem:[#allocation6 + $0x1c8] sm:$0xff]
    %v1314 = vld [vmem:[#allocation6 + $0x1d0] sm:$0xf]
    %v1315 = vld [vmem:[#allocation6 + $0x1d4] sm:$0xff]
    %v1316 = vld [vmem:[#allocation6 + $0x1dc] sm:$0xf]
    %v1317 = vld [vmem:[#allocation6 + $0x1e0] sm:$0xff]
    %v1318 = vld [vmem:[#allocation6 + $0x1e8] sm:$0xf]
    %v1319 = vld [vmem:[#allocation6 + $0x1ec] sm:$0xff]
    %v1320 = vld [vmem:[#allocation6 + $0x1f4] sm:$0xf]
    %v1321 = vld [vmem:[#allocation6 + $0x1f8] sm:$0xff]
    %v1322 = vld [vmem:[#allocation6 + $0x200] sm:$0xf]
    %v1323 = vld [vmem:[#allocation6 + $0x204] sm:$0xff]
    %v1324 = vld [vmem:[#allocation6 + $0x20c] sm:$0xf]
    %v1325 = vld [vmem:[#allocation6 + $0x210] sm:$0xff]
    %v1326 = vld [vmem:[#allocation6 + $0x218] sm:$0xf]
    %v1327 = vld [vmem:[#allocation6 + $0x21c] sm:$0xff]
    %v1328 = vld [vmem:[#allocation6 + $0x224] sm:$0xf]
    %v1329 = vld [vmem:[#allocation6 + $0x228] sm:$0xff]
    %v1330 = vld [vmem:[#allocation6 + $0x230] sm:$0xf]
    %v1331 = vld [vmem:[#allocation6 + $0x234] sm:$0xff]
    %v1332 = vld [vmem:[#allocation6 + $0x23c] sm:$0xf]
    %v1333 = vld [vmem:[#allocation6 + $0x240] sm:$0xff]
    %v1334 = vld [vmem:[#allocation6 + $0x248] sm:$0xf]
    %v1335 = vld [vmem:[#allocation6 + $0x24c] sm:$0xff]
    %v1336 = vld [vmem:[#allocation6 + $0x254] sm:$0xf]
    %v1337 = vld [vmem:[#allocation6 + $0x258] sm:$0xff]
    %v1338 = vld [vmem:[#allocation6 + $0x260] sm:$0xf]
    %v1339 = vld [vmem:[#allocation6 + $0x264] sm:$0xff]
    %v1340 = vld [vmem:[#allocation6 + $0x26c] sm:$0xf]
    %v1341 = vld [vmem:[#allocation6 + $0x270] sm:$0xff]
    %v1342 = vld [vmem:[#allocation6 + $0x278] sm:$0xf]
    %v1343 = vld [vmem:[#allocation6 + $0x27c] sm:$0xff]
    %v1344 = vld [vmem:[#allocation6 + $0x284] sm:$0xf]
    %v1345 = vld [vmem:[#allocation6 + $0x288] sm:$0xff]
    %v1346 = vld [vmem:[#allocation6 + $0x290] sm:$0xf]
    %v1347 = vld [vmem:[#allocation6 + $0x294] sm:$0xff]
    %v1348 = vld [vmem:[#allocation6 + $0x29c] sm:$0xf]
    %v1349 = vld [vmem:[#allocation6 + $0x2a0] sm:$0xff]
    %v1350 = vld [vmem:[#allocation6 + $0x2a8] sm:$0xf]
    %v1351 = vld [vmem:[#allocation6 + $0x2ac] sm:$0xff]
    %v1352 = vld [vmem:[#allocation6 + $0x2b4] sm:$0xf]
    %v1353 = vld [vmem:[#allocation6 + $0x2b8] sm:$0xff]
    %v1354 = vld [vmem:[#allocation6 + $0x2c0] sm:$0xf]
    %v1355 = vld [vmem:[#allocation6 + $0x2c4] sm:$0xff]
    %v1356 = vld [vmem:[#allocation6 + $0x2cc] sm:$0xf]
    %v1357 = vld [vmem:[#allocation6 + $0x2d0] sm:$0xff]
    %v1358 = vld [vmem:[#allocation6 + $0x2d8] sm:$0xf]
    %v1359 = vld [vmem:[#allocation6 + $0x2dc] sm:$0xff]
    %v1360 = vld [vmem:[#allocation6 + $0x2e4] sm:$0xf]
    %v1361 = vld [vmem:[#allocation6 + $0x2e8] sm:$0xff]
    %v1362 = vld [vmem:[#allocation6 + $0x2f0] sm:$0xf]
    %v1363 = vld [vmem:[#allocation6 + $0x2f4] sm:$0xff]
    %v1364 = vld [vmem:[#allocation6 + $0x2fc] sm:$0xf]
    %v1365 = vld [vmem:[%s6] sm:$0x7]
    %v1367 = vlaneseq
    %v1368 = vshrl.u32 %v1367, 7
    %v1369 = vsub.s32 0, %v1368
    %v1370 = vrot.slane %v1365, %v1369
    %v1371 = vlaneseq
    %v1372 = vshrl.u32 %v1371, 7
    %v1373 = vsub.s32 1, %v1372
    %v1374 = vrot.slane %v1365, %v1373
    %v1375 = vlaneseq
    %v1376 = vshrl.u32 %v1375, 7
    %v1377 = vsub.s32 2, %v1376
    %v1378 = vrot.slane %v1365, %v1377
    %v1510 = vunpack.c.l.b16 %v1237
    %v1511 = vunpack.c.h.b16 %v1237
    %v1512 = vunpack.c.l.b16 %v1238
    %v1513 = vunpack.c.l.b16 %v1239
    %v1514 = vunpack.c.h.b16 %v1239
    %v1515 = vunpack.c.l.b16 %v1240
    %v1516 = vunpack.c.l.b16 %v1241
    %v1517 = vunpack.c.h.b16 %v1241
    %v1518 = vunpack.c.l.b16 %v1242
    %v1519 = vunpack.c.l.b16 %v1243
    %v1520 = vunpack.c.h.b16 %v1243
    %v1521 = vunpack.c.l.b16 %v1244
    %v1522 = vunpack.c.l.b16 %v1245
    %v1523 = vunpack.c.h.b16 %v1245
    %v1524 = vunpack.c.l.b16 %v1246
    %v1525 = vunpack.c.l.b16 %v1247
    %v1526 = vunpack.c.h.b16 %v1247
    %v1527 = vunpack.c.l.b16 %v1248
    %v1528 = vunpack.c.l.b16 %v1249
    %v1529 = vunpack.c.h.b16 %v1249
    %v1530 = vunpack.c.l.b16 %v1250
    %v1531 = vunpack.c.l.b16 %v1251
    %v1532 = vunpack.c.h.b16 %v1251
    %v1533 = vunpack.c.l.b16 %v1252
    %v1534 = vunpack.c.l.b16 %v1253
    %v1535 = vunpack.c.h.b16 %v1253
    %v1536 = vunpack.c.l.b16 %v1254
    %v1537 = vunpack.c.l.b16 %v1255
    %v1538 = vunpack.c.h.b16 %v1255
    %v1539 = vunpack.c.l.b16 %v1256
    %v1540 = vunpack.c.l.b16 %v1257
    %v1541 = vunpack.c.h.b16 %v1257
    %v1542 = vunpack.c.l.b16 %v1258
    %v1543 = vunpack.c.l.b16 %v1259
    %v1544 = vunpack.c.h.b16 %v1259
    %v1545 = vunpack.c.l.b16 %v1260
    %v1546 = vunpack.c.l.b16 %v1261
    %v1547 = vunpack.c.h.b16 %v1261
    %v1548 = vunpack.c.l.b16 %v1262
    %v1549 = vunpack.c.l.b16 %v1263
    %v1550 = vunpack.c.h.b16 %v1263
    %v1551 = vunpack.c.l.b16 %v1264
    %v1552 = vunpack.c.l.b16 %v1265
    %v1553 = vunpack.c.h.b16 %v1265
    %v1554 = vunpack.c.l.b16 %v1266
    %v1555 = vunpack.c.l.b16 %v1267
    %v1556 = vunpack.c.h.b16 %v1267
    %v1557 = vunpack.c.l.b16 %v1268
    %v1558 = vunpack.c.l.b16 %v1269
    %v1559 = vunpack.c.h.b16 %v1269
    %v1560 = vunpack.c.l.b16 %v1270
    %v1561 = vunpack.c.l.b16 %v1271
    %v1562 = vunpack.c.h.b16 %v1271
    %v1563 = vunpack.c.l.b16 %v1272
    %v1564 = vunpack.c.l.b16 %v1273
    %v1565 = vunpack.c.h.b16 %v1273
    %v1566 = vunpack.c.l.b16 %v1274
    %v1567 = vunpack.c.l.b16 %v1275
    %v1568 = vunpack.c.h.b16 %v1275
    %v1569 = vunpack.c.l.b16 %v1276
    %v1570 = vunpack.c.l.b16 %v1277
    %v1571 = vunpack.c.h.b16 %v1277
    %v1572 = vunpack.c.l.b16 %v1278
    %v1573 = vunpack.c.l.b16 %v1279
    %v1574 = vunpack.c.h.b16 %v1279
    %v1575 = vunpack.c.l.b16 %v1280
    %v1576 = vunpack.c.l.b16 %v1281
    %v1577 = vunpack.c.h.b16 %v1281
    %v1578 = vunpack.c.l.b16 %v1282
    %v1579 = vunpack.c.l.b16 %v1283
    %v1580 = vunpack.c.h.b16 %v1283
    %v1581 = vunpack.c.l.b16 %v1284
    %v1582 = vunpack.c.l.b16 %v1285
    %v1583 = vunpack.c.h.b16 %v1285
    %v1584 = vunpack.c.l.b16 %v1286
    %v1585 = vunpack.c.l.b16 %v1287
    %v1586 = vunpack.c.h.b16 %v1287
    %v1587 = vunpack.c.l.b16 %v1288
    %v1588 = vunpack.c.l.b16 %v1289
    %v1589 = vunpack.c.h.b16 %v1289
    %v1590 = vunpack.c.l.b16 %v1290
    %v1591 = vunpack.c.l.b16 %v1291
    %v1592 = vunpack.c.h.b16 %v1291
    %v1593 = vunpack.c.l.b16 %v1292
    %v1594 = vunpack.c.l.b16 %v1293
    %v1595 = vunpack.c.h.b16 %v1293
    %v1596 = vunpack.c.l.b16 %v1294
    %v1597 = vunpack.c.l.b16 %v1295
    %v1598 = vunpack.c.h.b16 %v1295
    %v1599 = vunpack.c.l.b16 %v1296
    %v1600 = vunpack.c.l.b16 %v1297
    %v1601 = vunpack.c.h.b16 %v1297
    %v1602 = vunpack.c.l.b16 %v1298
    %v1603 = vunpack.c.l.b16 %v1299
    %v1604 = vunpack.c.h.b16 %v1299
    %v1605 = vunpack.c.l.b16 %v1300
    %v1606 = vunpack.c.l.b16 %v1301
    %v1607 = vunpack.c.h.b16 %v1301
    %v1608 = vunpack.c.l.b16 %v1302
    %v1609 = vunpack.c.l.b16 %v1303
    %v1610 = vunpack.c.h.b16 %v1303
    %v1611 = vunpack.c.l.b16 %v1304
    %v1612 = vunpack.c.l.b16 %v1305
    %v1613 = vunpack.c.h.b16 %v1305
    %v1614 = vunpack.c.l.b16 %v1306
    %v1615 = vunpack.c.l.b16 %v1307
    %v1616 = vunpack.c.h.b16 %v1307
    %v1617 = vunpack.c.l.b16 %v1308
    %v1618 = vunpack.c.l.b16 %v1309
    %v1619 = vunpack.c.h.b16 %v1309
    %v1620 = vunpack.c.l.b16 %v1310
    %v1621 = vunpack.c.l.b16 %v1311
    %v1622 = vunpack.c.h.b16 %v1311
    %v1623 = vunpack.c.l.b16 %v1312
    %v1624 = vunpack.c.l.b16 %v1313
    %v1625 = vunpack.c.h.b16 %v1313
    %v1626 = vunpack.c.l.b16 %v1314
    %v1627 = vunpack.c.l.b16 %v1315
    %v1628 = vunpack.c.h.b16 %v1315
    %v1629 = vunpack.c.l.b16 %v1316
    %v1630 = vunpack.c.l.b16 %v1317
    %v1631 = vunpack.c.h.b16 %v1317
    %v1632 = vunpack.c.l.b16 %v1318
    %v1633 = vunpack.c.l.b16 %v1319
    %v1634 = vunpack.c.h.b16 %v1319
    %v1635 = vunpack.c.l.b16 %v1320
    %v1636 = vunpack.c.l.b16 %v1321
    %v1637 = vunpack.c.h.b16 %v1321
    %v1638 = vunpack.c.l.b16 %v1322
    %v1639 = vunpack.c.l.b16 %v1323
    %v1640 = vunpack.c.h.b16 %v1323
    %v1641 = vunpack.c.l.b16 %v1324
    %v1642 = vunpack.c.l.b16 %v1325
    %v1643 = vunpack.c.h.b16 %v1325
    %v1644 = vunpack.c.l.b16 %v1326
    %v1645 = vunpack.c.l.b16 %v1327
    %v1646 = vunpack.c.h.b16 %v1327
    %v1647 = vunpack.c.l.b16 %v1328
    %v1648 = vunpack.c.l.b16 %v1329
    %v1649 = vunpack.c.h.b16 %v1329
    %v1650 = vunpack.c.l.b16 %v1330
    %v1651 = vunpack.c.l.b16 %v1331
    %v1652 = vunpack.c.h.b16 %v1331
    %v1653 = vunpack.c.l.b16 %v1332
    %v1654 = vunpack.c.l.b16 %v1333
    %v1655 = vunpack.c.h.b16 %v1333
    %v1656 = vunpack.c.l.b16 %v1334
    %v1657 = vunpack.c.l.b16 %v1335
    %v1658 = vunpack.c.h.b16 %v1335
    %v1659 = vunpack.c.l.b16 %v1336
    %v1660 = vunpack.c.l.b16 %v1337
    %v1661 = vunpack.c.h.b16 %v1337
    %v1662 = vunpack.c.l.b16 %v1338
    %v1663 = vunpack.c.l.b16 %v1339
    %v1664 = vunpack.c.h.b16 %v1339
    %v1665 = vunpack.c.l.b16 %v1340
    %v1666 = vunpack.c.l.b16 %v1341
    %v1667 = vunpack.c.h.b16 %v1341
    %v1668 = vunpack.c.l.b16 %v1342
    %v1669 = vunpack.c.l.b16 %v1343
    %v1670 = vunpack.c.h.b16 %v1343
    %v1671 = vunpack.c.l.b16 %v1344
    %v1672 = vunpack.c.l.b16 %v1345
    %v1673 = vunpack.c.h.b16 %v1345
    %v1674 = vunpack.c.l.b16 %v1346
    %v1675 = vunpack.c.l.b16 %v1347
    %v1676 = vunpack.c.h.b16 %v1347
    %v1677 = vunpack.c.l.b16 %v1348
    %v1678 = vunpack.c.l.b16 %v1349
    %v1679 = vunpack.c.h.b16 %v1349
    %v1680 = vunpack.c.l.b16 %v1350
    %v1681 = vunpack.c.l.b16 %v1351
    %v1682 = vunpack.c.h.b16 %v1351
    %v1683 = vunpack.c.l.b16 %v1352
    %v1684 = vunpack.c.l.b16 %v1353
    %v1685 = vunpack.c.h.b16 %v1353
    %v1686 = vunpack.c.l.b16 %v1354
    %v1687 = vunpack.c.l.b16 %v1355
    %v1688 = vunpack.c.h.b16 %v1355
    %v1689 = vunpack.c.l.b16 %v1356
    %v1690 = vunpack.c.l.b16 %v1357
    %v1691 = vunpack.c.h.b16 %v1357
    %v1692 = vunpack.c.l.b16 %v1358
    %v1693 = vunpack.c.l.b16 %v1359
    %v1694 = vunpack.c.h.b16 %v1359
    %v1695 = vunpack.c.l.b16 %v1360
    %v1696 = vunpack.c.l.b16 %v1361
    %v1697 = vunpack.c.h.b16 %v1361
    %v1698 = vunpack.c.l.b16 %v1362
    %v1699 = vunpack.c.l.b16 %v1363
    %v1700 = vunpack.c.h.b16 %v1363
    %v1701 = vunpack.c.l.b16 %v1364
    %v1702 = vpack.c.b16 %v1513, %v1510
    %v1703 = vpack.c.b16 %v1514, %v1511
    %v1704 = vpack.c.b16 %v1515, %v1512
    %v1705 = vpack.c.b16 %v1519, %v1516
    %v1706 = vpack.c.b16 %v1520, %v1517
    %v1707 = vpack.c.b16 %v1521, %v1518
    %v1708 = vpack.c.b16 %v1525, %v1522
    %v1709 = vpack.c.b16 %v1526, %v1523
    %v1710 = vpack.c.b16 %v1527, %v1524
    %v1711 = vpack.c.b16 %v1531, %v1528
    %v1712 = vpack.c.b16 %v1532, %v1529
    %v1713 = vpack.c.b16 %v1533, %v1530
    %v1714 = vpack.c.b16 %v1537, %v1534
    %v1715 = vpack.c.b16 %v1538, %v1535
    %v1716 = vpack.c.b16 %v1539, %v1536
    %v1717 = vpack.c.b16 %v1543, %v1540
    %v1718 = vpack.c.b16 %v1544, %v1541
    %v1719 = vpack.c.b16 %v1545, %v1542
    %v1720 = vpack.c.b16 %v1549, %v1546
    %v1721 = vpack.c.b16 %v1550, %v1547
    %v1722 = vpack.c.b16 %v1551, %v1548
    %v1723 = vpack.c.b16 %v1555, %v1552
    %v1724 = vpack.c.b16 %v1556, %v1553
    %v1725 = vpack.c.b16 %v1557, %v1554
    %v1726 = vpack.c.b16 %v1561, %v1558
    %v1727 = vpack.c.b16 %v1562, %v1559
    %v1728 = vpack.c.b16 %v1563, %v1560
    %v1729 = vpack.c.b16 %v1567, %v1564
    %v1730 = vpack.c.b16 %v1568, %v1565
    %v1731 = vpack.c.b16 %v1569, %v1566
    %v1732 = vpack.c.b16 %v1573, %v1570
    %v1733 = vpack.c.b16 %v1574, %v1571
    %v1734 = vpack.c.b16 %v1575, %v1572
    %v1735 = vpack.c.b16 %v1579, %v1576
    %v1736 = vpack.c.b16 %v1580, %v1577
    %v1737 = vpack.c.b16 %v1581, %v1578
    %v1738 = vpack.c.b16 %v1585, %v1582
    %v1739 = vpack.c.b16 %v1586, %v1583
    %v1740 = vpack.c.b16 %v1587, %v1584
    %v1741 = vpack.c.b16 %v1591, %v1588
    %v1742 = vpack.c.b16 %v1592, %v1589
    %v1743 = vpack.c.b16 %v1593, %v1590
    %v1744 = vpack.c.b16 %v1597, %v1594
    %v1745 = vpack.c.b16 %v1598, %v1595
    %v1746 = vpack.c.b16 %v1599, %v1596
    %v1747 = vpack.c.b16 %v1603, %v1600
    %v1748 = vpack.c.b16 %v1604, %v1601
    %v1749 = vpack.c.b16 %v1605, %v1602
    %v1750 = vpack.c.b16 %v1609, %v1606
    %v1751 = vpack.c.b16 %v1610, %v1607
    %v1752 = vpack.c.b16 %v1611, %v1608
    %v1753 = vpack.c.b16 %v1615, %v1612
    %v1754 = vpack.c.b16 %v1616, %v1613
    %v1755 = vpack.c.b16 %v1617, %v1614
    %v1756 = vpack.c.b16 %v1621, %v1618
    %v1757 = vpack.c.b16 %v1622, %v1619
    %v1758 = vpack.c.b16 %v1623, %v1620
    %v1759 = vpack.c.b16 %v1627, %v1624
    %v1760 = vpack.c.b16 %v1628, %v1625
    %v1761 = vpack.c.b16 %v1629, %v1626
    %v1762 = vpack.c.b16 %v1633, %v1630
    %v1763 = vpack.c.b16 %v1634, %v1631
    %v1764 = vpack.c.b16 %v1635, %v1632
    %v1765 = vpack.c.b16 %v1639, %v1636
    %v1766 = vpack.c.b16 %v1640, %v1637
    %v1767 = vpack.c.b16 %v1641, %v1638
    %v1768 = vpack.c.b16 %v1645, %v1642
    %v1769 = vpack.c.b16 %v1646, %v1643
    %v1770 = vpack.c.b16 %v1647, %v1644
    %v1771 = vpack.c.b16 %v1651, %v1648
    %v1772 = vpack.c.b16 %v1652, %v1649
    %v1773 = vpack.c.b16 %v1653, %v1650
    %v1774 = vpack.c.b16 %v1657, %v1654
    %v1775 = vpack.c.b16 %v1658, %v1655
    %v1776 = vpack.c.b16 %v1659, %v1656
    %v1777 = vpack.c.b16 %v1663, %v1660
    %v1778 = vpack.c.b16 %v1664, %v1661
    %v1779 = vpack.c.b16 %v1665, %v1662
    %v1780 = vpack.c.b16 %v1669, %v1666
    %v1781 = vpack.c.b16 %v1670, %v1667
    %v1782 = vpack.c.b16 %v1671, %v1668
    %v1783 = vpack.c.b16 %v1675, %v1672
    %v1784 = vpack.c.b16 %v1676, %v1673
    %v1785 = vpack.c.b16 %v1677, %v1674
    %v1786 = vpack.c.b16 %v1681, %v1678
    %v1787 = vpack.c.b16 %v1682, %v1679
    %v1788 = vpack.c.b16 %v1683, %v1680
    %v1789 = vpack.c.b16 %v1687, %v1684
    %v1790 = vpack.c.b16 %v1688, %v1685
    %v1791 = vpack.c.b16 %v1689, %v1686
    %v1792 = vpack.c.b16 %v1693, %v1690
    %v1793 = vpack.c.b16 %v1694, %v1691
    %v1794 = vpack.c.b16 %v1695, %v1692
    %v1795 = vpack.c.b16 %v1699, %v1696
    %v1796 = vpack.c.b16 %v1700, %v1697
    %v1797 = vpack.c.b16 %v1701, %v1698
    %1894 = vmatprep.subr.bf16.mxu0 %v1703
    %1895 = vmatpush1.bf16.msra.mxu0 %v1702
    %1896 = vmatprep.subr.bf16.mxu0 %v1706
    %1897 = vmatpush1.bf16.msra.mxu0 %v1705
    %1898 = vmatprep.subr.bf16.mxu0 %v1709
    %1899 = vmatpush1.bf16.msra.mxu0 %v1708
    %1900 = vmatprep.subr.bf16.mxu0 %v1712
    %1901 = vmatpush1.bf16.msra.mxu0 %v1711
    %1902 = vmatprep.subr.bf16.mxu0 %v1715
    %1903 = vmatpush1.bf16.msra.mxu0 %v1714
    %1904 = vmatprep.subr.bf16.mxu0 %v1718
    %1905 = vmatpush1.bf16.msra.mxu0 %v1717
    %1906 = vmatprep.subr.bf16.mxu0 %v1721
    %1907 = vmatpush1.bf16.msra.mxu0 %v1720
    %1908 = vmatprep.subr.bf16.mxu0 %v1724
    %1909 = vmatpush1.bf16.msra.mxu0 %v1723
    %1910 = vmatprep.subr.bf16.mxu0 %v1727
    %1911 = vmatpush1.bf16.msra.mxu0 %v1726
    %1912 = vmatprep.subr.bf16.mxu0 %v1730
    %1913 = vmatpush1.bf16.msra.mxu0 %v1729
    %1914 = vmatprep.subr.bf16.mxu0 %v1733
    %1915 = vmatpush1.bf16.msra.mxu0 %v1732
    %1916 = vmatprep.subr.bf16.mxu0 %v1736
    %1917 = vmatpush1.bf16.msra.mxu0 %v1735
    %1918 = vmatprep.subr.bf16.mxu0 %v1739
    %1919 = vmatpush1.bf16.msra.mxu0 %v1738
    %1920 = vmatprep.subr.bf16.mxu0 %v1742
    %1921 = vmatpush1.bf16.msra.mxu0 %v1741
    %1922 = vmatprep.subr.bf16.mxu0 %v1745
    %1923 = vmatpush1.bf16.msra.mxu0 %v1744
    %1924 = vmatprep.subr.bf16.mxu0 %v1748
    %1925 = vmatpush1.bf16.msra.mxu0 %v1747
    %1926 = vmatprep.mubr.bf16.mxu0 %v412
    %1927 = vmatmul.mubr.bf16.gmra.mrb[0].mxu0 %v411
    %v1928 = vpop.f32.mrb[0].mxu0
    %v1929 = vadd.f32 %v1370, %v1928
    %v1930 = vpop.f32.mrb[0].mxu0
    %v1931 = vadd.f32 %v1374, %v1930
    %v1932 = vpop.f32.mrb[0].mxu0
    %v1933 = vpop.f32.mrb[0].mxu0
    %1934 = vdwg.mxu0
    %1935 = vmatprep.subr.bf16.mxu0 %v1751
    %1936 = vmatpush1.bf16.msra.mxu0 %v1750
    %1937 = vmatprep.subr.bf16.mxu0 %v1754
    %1938 = vmatpush1.bf16.msra.mxu0 %v1753
    %1939 = vmatprep.subr.bf16.mxu0 %v1757
    %1940 = vmatpush1.bf16.msra.mxu0 %v1756
    %1941 = vmatprep.subr.bf16.mxu0 %v1760
    %1942 = vmatpush1.bf16.msra.mxu0 %v1759
    %1943 = vmatprep.subr.bf16.mxu0 %v1763
    %1944 = vmatpush1.bf16.msra.mxu0 %v1762
    %1945 = vmatprep.subr.bf16.mxu0 %v1766
    %1946 = vmatpush1.bf16.msra.mxu0 %v1765
    %1947 = vmatprep.subr.bf16.mxu0 %v1769
    %1948 = vmatpush1.bf16.msra.mxu0 %v1768
    %1949 = vmatprep.subr.bf16.mxu0 %v1772
    %1950 = vmatpush1.bf16.msra.mxu0 %v1771
    %1951 = vmatprep.subr.bf16.mxu0 %v1775
    %1952 = vmatpush1.bf16.msra.mxu0 %v1774
    %1953 = vmatprep.subr.bf16.mxu0 %v1778
    %1954 = vmatpush1.bf16.msra.mxu0 %v1777
    %1955 = vmatprep.subr.bf16.mxu0 %v1781
    %1956 = vmatpush1.bf16.msra.mxu0 %v1780
    %1957 = vmatprep.subr.bf16.mxu0 %v1784
    %1958 = vmatpush1.bf16.msra.mxu0 %v1783
    %1959 = vmatprep.subr.bf16.mxu0 %v1787
    %1960 = vmatpush1.bf16.msra.mxu0 %v1786
    %1961 = vmatprep.subr.bf16.mxu0 %v1790
    %1962 = vmatpush1.bf16.msra.mxu0 %v1789
    %1963 = vmatprep.subr.bf16.mxu0 %v1793
    %1964 = vmatpush1.bf16.msra.mxu0 %v1792
    %1965 = vmatprep.subr.bf16.mxu0 %v1796
    %1966 = vmatpush1.bf16.msra.mxu0 %v1795
    %1967 = vmatprep.mubr.bf16.mxu0 %v414
    %1968 = vmatmul.mubr.bf16.gmra.mrb[0].mxu0 %v413
    %v1969 = vpop.f32.mrb[0].mxu0
    %v1970 = vadd.f32 %v1929, %v1969
    %v1971 = vpop.f32.mrb[0].mxu0
    %v1972 = vadd.f32 %v1931, %v1971
    %v1973 = vpop.f32.mrb[0].mxu0
    %v1974 = vpop.f32.mrb[0].mxu0
    %1975 = vdwg.mxu0
    %1976 = vmatprep.subr.bf16.mxu0 0
    %1977 = vmatpush1.bf16.msra.mxu0 %v1704
    %1978 = vmatprep.subr.bf16.mxu0 0
    %1979 = vmatpush1.bf16.msra.mxu0 %v1707
    %1980 = vmatprep.subr.bf16.mxu0 0
    %1981 = vmatpush1.bf16.msra.mxu0 %v1710
    %1982 = vmatprep.subr.bf16.mxu0 0
    %1983 = vmatpush1.bf16.msra.mxu0 %v1713
    %1984 = vmatprep.subr.bf16.mxu0 0
    %1985 = vmatpush1.bf16.msra.mxu0 %v1716
    %1986 = vmatprep.subr.bf16.mxu0 0
    %1987 = vmatpush1.bf16.msra.mxu0 %v1719
    %1988 = vmatprep.subr.bf16.mxu0 0
    %1989 = vmatpush1.bf16.msra.mxu0 %v1722
    %1990 = vmatprep.subr.bf16.mxu0 0
    %1991 = vmatpush1.bf16.msra.mxu0 %v1725
    %1992 = vmatprep.subr.bf16.mxu0 0
    %1993 = vmatpush1.bf16.msra.mxu0 %v1728
    %1994 = vmatprep.subr.bf16.mxu0 0
    %1995 = vmatpush1.bf16.msra.mxu0 %v1731
    %1996 = vmatprep.subr.bf16.mxu0 0
    %1997 = vmatpush1.bf16.msra.mxu0 %v1734
    %1998 = vmatprep.subr.bf16.mxu0 0
    %1999 = vmatpush1.bf16.msra.mxu0 %v1737
    %2000 = vmatprep.subr.bf16.mxu0 0
    %2001 = vmatpush1.bf16.msra.mxu0 %v1740
    %2002 = vmatprep.subr.bf16.mxu0 0
    %2003 = vmatpush1.bf16.msra.mxu0 %v1743
    %2004 = vmatprep.subr.bf16.mxu0 0
    %2005 = vmatpush1.bf16.msra.mxu0 %v1746
    %2006 = vmatprep.subr.bf16.mxu0 0
    %2007 = vmatpush1.bf16.msra.mxu0 %v1749
    %2008 = vmatprep.mubr.bf16.mxu0 %v412
    %2009 = vmatmul.mubr.bf16.gmra.mrb[0].mxu0 %v411
    %v2010 = vpop.f32.mrb[0].mxu0
    %v2011 = vadd.f32 %v1378, %v2010
    %v2012 = vpop.f32.mrb[0].mxu0
    %v2013 = vpop.f32.mrb[0].mxu0
    %v2014 = vpop.f32.mrb[0].mxu0
    %2015 = vdwg.mxu0
    %2016 = vmatprep.subr.bf16.mxu0 0
    %2017 = vmatpush1.bf16.msra.mxu0 %v1752
    %2018 = vmatprep.subr.bf16.mxu0 0
    %2019 = vmatpush1.bf16.msra.mxu0 %v1755
    %2020 = vmatprep.subr.bf16.mxu0 0
    %2021 = vmatpush1.bf16.msra.mxu0 %v1758
    %2022 = vmatprep.subr.bf16.mxu0 0
    %2023 = vmatpush1.bf16.msra.mxu0 %v1761
    %2024 = vmatprep.subr.bf16.mxu0 0
    %2025 = vmatpush1.bf16.msra.mxu0 %v1764
    %2026 = vmatprep.subr.bf16.mxu0 0
    %2027 = vmatpush1.bf16.msra.mxu0 %v1767
    %2028 = vmatprep.subr.bf16.mxu0 0
    %2029 = vmatpush1.bf16.msra.mxu0 %v1770
    %2030 = vmatprep.subr.bf16.mxu0 0
    %2031 = vmatpush1.bf16.msra.mxu0 %v1773
    %2032 = vmatprep.subr.bf16.mxu0 0
    %2033 = vmatpush1.bf16.msra.mxu0 %v1776
    %2034 = vmatprep.subr.bf16.mxu0 0
    %2035 = vmatpush1.bf16.msra.mxu0 %v1779
    %2036 = vmatprep.subr.bf16.mxu0 0
    %2037 = vmatpush1.bf16.msra.mxu0 %v1782
    %2038 = vmatprep.subr.bf16.mxu0 0
    %2039 = vmatpush1.bf16.msra.mxu0 %v1785
    %2040 = vmatprep.subr.bf16.mxu0 0
    %2041 = vmatpush1.bf16.msra.mxu0 %v1788
    %2042 = vmatprep.subr.bf16.mxu0 0
    %2043 = vmatpush1.bf16.msra.mxu0 %v1791
    %2044 = vmatprep.subr.bf16.mxu0 0
    %2045 = vmatpush1.bf16.msra.mxu0 %v1794
    %2046 = vmatprep.subr.bf16.mxu0 0
    %2047 = vmatpush1.bf16.msra.mxu0 %v1797
    %2048 = vmatprep.mubr.bf16.mxu0 %v414
    %2049 = vmatmul.mubr.bf16.gmra.mrb[0].mxu0 %v413
    %v2050 = vpop.f32.mrb[0].mxu0
    %v2051 = vadd.f32 %v2011, %v2050
    %v2052 = vpop.f32.mrb[0].mxu0
    %v2053 = vpop.f32.mrb[0].mxu0
    %v2054 = vpop.f32.mrb[0].mxu0
    %2055 = vdwg.mxu0
    %v2056 = vmax.f32 %v1970, 0.0
    %v2057 = vmax.f32 %v1972, 0.0
    %v2058 = vmax.f32 %v2051, 0.0
    %v2059 = vpack.c.bf16 %v2056, %v1234
    %v2060 = vpack.c.bf16 %v2057, %v1235
    %v2061 = vpack.c.bf16 %v2058, %v1236
    %v2062 = vld [vmem:[#allocation7] sm:$0xf]
    %v2063 = vld [vmem:[#allocation7 + $0x4] sm:$0xf]
    %v2064 = vld [vmem:[#allocation7 + $0x8] sm:$0xf]
    %v2065 = vld [vmem:[#allocation7 + $0xc] sm:$0xf]
    %v2066 = vld [vmem:[#allocation7 + $0x10] sm:$0xf]
    %v2067 = vld [vmem:[#allocation7 + $0x14] sm:$0xf]
    %v2068 = vld [vmem:[#allocation7 + $0x18] sm:$0xf]
    %v2069 = vld [vmem:[#allocation7 + $0x1c] sm:$0xf]
    %v2070 = vld [vmem:[#allocation7 + $0x20] sm:$0xf]
    %v2071 = vld [vmem:[#allocation7 + $0x24] sm:$0xf]
    %v2072 = vld [vmem:[#allocation7 + $0x28] sm:$0xf]
    %v2073 = vld [vmem:[#allocation7 + $0x2c] sm:$0xf]
    %v2074 = vld [vmem:[#allocation7 + $0x30] sm:$0xf]
    %v2075 = vld [vmem:[#allocation7 + $0x34] sm:$0xf]
    %v2076 = vld [vmem:[#allocation7 + $0x38] sm:$0xf]
    %v2077 = vld [vmem:[#allocation7 + $0x3c] sm:$0xf]
    %v2078 = vld [vmem:[#allocation7 + $0x40] sm:$0xf]
    %v2079 = vld [vmem:[#allocation7 + $0x44] sm:$0xf]
    %v2080 = vld [vmem:[#allocation7 + $0x48] sm:$0xf]
    %v2081 = vld [vmem:[#allocation7 + $0x4c] sm:$0xf]
    %v2082 = vld [vmem:[#allocation7 + $0x50] sm:$0xf]
    %v2083 = vld [vmem:[#allocation7 + $0x54] sm:$0xf]
    %v2084 = vld [vmem:[#allocation7 + $0x58] sm:$0xf]
    %v2085 = vld [vmem:[#allocation7 + $0x5c] sm:$0xf]
    %v2086 = vld [vmem:[#allocation7 + $0x60] sm:$0xf]
    %v2087 = vld [vmem:[#allocation7 + $0x64] sm:$0xf]
    %v2088 = vld [vmem:[#allocation7 + $0x68] sm:$0xf]
    %v2089 = vld [vmem:[#allocation7 + $0x6c] sm:$0xf]
    %v2090 = vld [vmem:[#allocation7 + $0x70] sm:$0xf]
    %v2091 = vld [vmem:[#allocation7 + $0x74] sm:$0xf]
    %v2092 = vld [vmem:[#allocation7 + $0x78] sm:$0xf]
    %v2093 = vld [vmem:[#allocation7 + $0x7c] sm:$0xf]
    %v2094 = vld [vmem:[#allocation7 + $0x80] sm:$0xf]
    %v2095 = vld [vmem:[#allocation7 + $0x84] sm:$0xf]
    %v2096 = vld [vmem:[#allocation7 + $0x88] sm:$0xf]
    %v2097 = vld [vmem:[#allocation7 + $0x8c] sm:$0xf]
    %v2098 = vld [vmem:[#allocation7 + $0x90] sm:$0xf]
    %v2099 = vld [vmem:[#allocation7 + $0x94] sm:$0xf]
    %v2100 = vld [vmem:[#allocation7 + $0x98] sm:$0xf]
    %v2101 = vld [vmem:[#allocation7 + $0x9c] sm:$0xf]
    %v2102 = vld [vmem:[#allocation7 + $0xa0] sm:$0xf]
    %v2103 = vld [vmem:[#allocation7 + $0xa4] sm:$0xf]
    %v2104 = vld [vmem:[#allocation7 + $0xa8] sm:$0xf]
    %v2105 = vld [vmem:[#allocation7 + $0xac] sm:$0xf]
    %v2106 = vld [vmem:[#allocation7 + $0xb0] sm:$0xf]
    %v2107 = vld [vmem:[#allocation7 + $0xb4] sm:$0xf]
    %v2108 = vld [vmem:[#allocation7 + $0xb8] sm:$0xf]
    %v2109 = vld [vmem:[#allocation7 + $0xbc] sm:$0xf]
    %v2110 = vld [vmem:[%s8] sm:$0x1]
    %v2112 = vlaneseq
    %v2113 = vshrl.u32 %v2112, 7
    %v2114 = vsub.s32 0, %v2113
    %v2115 = vrot.slane %v2110, %v2114
    %v2165 = vunpack.c.l.b16 %v2062
    %v2166 = vunpack.c.l.b16 %v2063
    %v2167 = vunpack.c.l.b16 %v2064
    %v2168 = vunpack.c.l.b16 %v2065
    %v2169 = vunpack.c.l.b16 %v2066
    %v2170 = vunpack.c.l.b16 %v2067
    %v2171 = vunpack.c.l.b16 %v2068
    %v2172 = vunpack.c.l.b16 %v2069
    %v2173 = vunpack.c.l.b16 %v2070
    %v2174 = vunpack.c.l.b16 %v2071
    %v2175 = vunpack.c.l.b16 %v2072
    %v2176 = vunpack.c.l.b16 %v2073
    %v2177 = vunpack.c.l.b16 %v2074
    %v2178 = vunpack.c.l.b16 %v2075
    %v2179 = vunpack.c.l.b16 %v2076
    %v2180 = vunpack.c.l.b16 %v2077
    %v2181 = vunpack.c.l.b16 %v2078
    %v2182 = vunpack.c.l.b16 %v2079
    %v2183 = vunpack.c.l.b16 %v2080
    %v2184 = vunpack.c.l.b16 %v2081
    %v2185 = vunpack.c.l.b16 %v2082
    %v2186 = vunpack.c.l.b16 %v2083
    %v2187 = vunpack.c.l.b16 %v2084
    %v2188 = vunpack.c.l.b16 %v2085
    %v2189 = vunpack.c.l.b16 %v2086
    %v2190 = vunpack.c.l.b16 %v2087
    %v2191 = vunpack.c.l.b16 %v2088
    %v2192 = vunpack.c.l.b16 %v2089
    %v2193 = vunpack.c.l.b16 %v2090
    %v2194 = vunpack.c.l.b16 %v2091
    %v2195 = vunpack.c.l.b16 %v2092
    %v2196 = vunpack.c.l.b16 %v2093
    %v2197 = vunpack.c.l.b16 %v2094
    %v2198 = vunpack.c.l.b16 %v2095
    %v2199 = vunpack.c.l.b16 %v2096
    %v2200 = vunpack.c.l.b16 %v2097
    %v2201 = vunpack.c.l.b16 %v2098
    %v2202 = vunpack.c.l.b16 %v2099
    %v2203 = vunpack.c.l.b16 %v2100
    %v2204 = vunpack.c.l.b16 %v2101
    %v2205 = vunpack.c.l.b16 %v2102
    %v2206 = vunpack.c.l.b16 %v2103
    %v2207 = vunpack.c.l.b16 %v2104
    %v2208 = vunpack.c.l.b16 %v2105
    %v2209 = vunpack.c.l.b16 %v2106
    %v2210 = vunpack.c.l.b16 %v2107
    %v2211 = vunpack.c.l.b16 %v2108
    %v2212 = vunpack.c.l.b16 %v2109
    %v2213 = vpack.c.b16 %v2166, %v2165
    %v2214 = vpack.c.b16 %v2168, %v2167
    %v2215 = vpack.c.b16 %v2170, %v2169
    %v2216 = vpack.c.b16 %v2172, %v2171
    %v2217 = vpack.c.b16 %v2174, %v2173
    %v2218 = vpack.c.b16 %v2176, %v2175
    %v2219 = vpack.c.b16 %v2178, %v2177
    %v2220 = vpack.c.b16 %v2180, %v2179
    %v2221 = vpack.c.b16 %v2182, %v2181
    %v2222 = vpack.c.b16 %v2184, %v2183
    %v2223 = vpack.c.b16 %v2186, %v2185
    %v2224 = vpack.c.b16 %v2188, %v2187
    %v2225 = vpack.c.b16 %v2190, %v2189
    %v2226 = vpack.c.b16 %v2192, %v2191
    %v2227 = vpack.c.b16 %v2194, %v2193
    %v2228 = vpack.c.b16 %v2196, %v2195
    %v2229 = vpack.c.b16 %v2198, %v2197
    %v2230 = vpack.c.b16 %v2200, %v2199
    %v2231 = vpack.c.b16 %v2202, %v2201
    %v2232 = vpack.c.b16 %v2204, %v2203
    %v2233 = vpack.c.b16 %v2206, %v2205
    %v2234 = vpack.c.b16 %v2208, %v2207
    %v2235 = vpack.c.b16 %v2210, %v2209
    %v2236 = vpack.c.b16 %v2212, %v2211
    %2261 = vmatprep.subr.bf16.mxu0 0
    %2262 = vmatpush1.bf16.msra.mxu0 %v2213
    %2263 = vmatprep.subr.bf16.mxu0 0
    %2264 = vmatpush1.bf16.msra.mxu0 %v2214
    %2265 = vmatprep.subr.bf16.mxu0 0
    %2266 = vmatpush1.bf16.msra.mxu0 %v2215
    %2267 = vmatprep.subr.bf16.mxu0 0
    %2268 = vmatpush1.bf16.msra.mxu0 %v2216
    %2269 = vmatprep.subr.bf16.mxu0 0
    %2270 = vmatpush1.bf16.msra.mxu0 %v2217
    %2271 = vmatprep.subr.bf16.mxu0 0
    %2272 = vmatpush1.bf16.msra.mxu0 %v2218
    %2273 = vmatprep.subr.bf16.mxu0 0
    %2274 = vmatpush1.bf16.msra.mxu0 %v2219
    %2275 = vmatprep.subr.bf16.mxu0 0
    %2276 = vmatpush1.bf16.msra.mxu0 %v2220
    %2277 = vmatprep.subr.bf16.mxu0 0
    %2278 = vmatpush1.bf16.msra.mxu0 %v2221
    %2279 = vmatprep.subr.bf16.mxu0 0
    %2280 = vmatpush1.bf16.msra.mxu0 %v2222
    %2281 = vmatprep.subr.bf16.mxu0 0
    %2282 = vmatpush1.bf16.msra.mxu0 %v2223
    %2283 = vmatprep.subr.bf16.mxu0 0
    %2284 = vmatpush1.bf16.msra.mxu0 %v2224
    %2285 = vmatprep.subr.bf16.mxu0 0
    %2286 = vmatpush1.bf16.msra.mxu0 %v2225
    %2287 = vmatprep.subr.bf16.mxu0 0
    %2288 = vmatpush1.bf16.msra.mxu0 %v2226
    %2289 = vmatprep.subr.bf16.mxu0 0
    %2290 = vmatpush1.bf16.msra.mxu0 %v2227
    %2291 = vmatprep.subr.bf16.mxu0 0
    %2292 = vmatpush1.bf16.msra.mxu0 %v2228
    %2293 = vmatprep.mubr.bf16.mxu0 %v2060
    %2294 = vmatmul.mubr.bf16.gmra.mrb[0].mxu0 %v2059
    %v2295 = vpop.f32.mrb[0].mxu0
    %v2296 = vadd.f32 %v2115, %v2295
    %v2297 = vpop.f32.mrb[0].mxu0
    %v2298 = vpop.f32.mrb[0].mxu0
    %v2299 = vadd.f32 %v2115, %v2298
    %v2300 = vpop.f32.mrb[0].mxu0
    %2301 = vdwg.mxu0
    %2302 = vmatprep.subr.bf16.mxu0 0
    %2303 = vmatpush1.bf16.msra.mxu0 %v2229
    %2304 = vmatprep.subr.bf16.mxu0 0
    %2305 = vmatpush1.bf16.msra.mxu0 %v2230
    %2306 = vmatprep.subr.bf16.mxu0 0
    %2307 = vmatpush1.bf16.msra.mxu0 %v2231
    %2308 = vmatprep.subr.bf16.mxu0 0
    %2309 = vmatpush1.bf16.msra.mxu0 %v2232
    %2310 = vmatprep.subr.bf16.mxu0 0
    %2311 = vmatpush1.bf16.msra.mxu0 %v2233
    %2312 = vmatprep.subr.bf16.mxu0 0
    %2313 = vmatpush1.bf16.msra.mxu0 %v2234
    %2314 = vmatprep.subr.bf16.mxu0 0
    %2315 = vmatpush1.bf16.msra.mxu0 %v2235
    %2316 = vmatprep.subr.bf16.mxu0 0
    %2317 = vmatpush1.bf16.msra.mxu0 %v2236
    %2318 = vmatprep.subr.bf16.mxu0 0
    %2319 = vmatpush1.bf16.msra.mxu0 0
    %2320 = vmatprep.subr.bf16.mxu0 0
    %2321 = vmatpush1.bf16.msra.mxu0 0
    %2322 = vmatprep.subr.bf16.mxu0 0
    %2323 = vmatpush1.bf16.msra.mxu0 0
    %2324 = vmatprep.subr.bf16.mxu0 0
    %2325 = vmatpush1.bf16.msra.mxu0 0
    %2326 = vmatprep.subr.bf16.mxu0 0
    %2327 = vmatpush1.bf16.msra.mxu0 0
    %2328 = vmatprep.subr.bf16.mxu0 0
    %2329 = vmatpush1.bf16.msra.mxu0 0
    %2330 = vmatprep.subr.bf16.mxu0 0
    %2331 = vmatpush1.bf16.msra.mxu0 0
    %2332 = vmatprep.subr.bf16.mxu0 0
    %2333 = vmatpush1.bf16.msra.mxu0 0
    %2334 = vmatprep.mubr.bf16.mxu0 0
    %2335 = vmatmul.mubr.bf16.gmra.mrb[0].mxu0 %v2061
    %v2336 = vpop.f32.mrb[0].mxu0
    %v2337 = vadd.f32 %v2296, %v2336
    %v2338 = vpop.f32.mrb[0].mxu0
    %v2339 = vpop.f32.mrb[0].mxu0
    %v2340 = vadd.f32 %v2299, %v2339
    %v2341 = vpop.f32.mrb[0].mxu0
    %2342 = vdwg.mxu0
    %v2343 = vlaneseq
    %v2344 = vshrl.u32 %v2343, 7
    %v2345 = vlaneseq
    %v2346 = vand.u32 %v2345, 127
    %vm2347 = vcmp.lt.s32.totalorder %v2344, 2
    %vm2348 = vcmp.lt.s32.totalorder %v2346, 8
    %vm2349 = vmand %vm2347, %vm2348
    %v2350 = vsel %vm2349, %v2337, 0.0
    %2351 = vadd.xlane.f32.xlu0 %v2350
    %v2352 = vpop.xlane.xlu0 %2351
    %v2353 = vrot.slane %v2352, 4
    %v2354 = vadd.f32 %v2352, %v2353
    %v2355 = vrot.slane %v2354, 2
    %v2356 = vadd.f32 %v2354, %v2355
    %v2357 = vrot.slane %v2356, 1
    %v2358 = vadd.f32 %v2356, %v2357
    %s2359 = vtos %v2358
    %s2360 = smul.f32 %s2359, 0.0625
    %2362 = vset.pattern.permute.xlu0 8
    %2363 = vperm.xlu0 %2362, %v2337
    %v2364 = vpop.permute.xlu0 %2363
    %v2366 = vadd.f32 %v2337, %v2364
    %v2367 = vstv %s2360
    %v2368 = vsub.f32 %v2366, %v2367
    %2369 = vst [vmem:[%s9] sm:$0xff] %v2368
    %v2370 = vsel %vm2349, %v2340, 0.0
    %2371 = vadd.xlane.f32.xlu0 %v2370
    %v2372 = vpop.xlane.xlu0 %2371
    %v2373 = vrot.slane %v2372, 4
    %v2374 = vadd.f32 %v2372, %v2373
    %v2375 = vrot.slane %v2374, 2
    %v2376 = vadd.f32 %v2374, %v2375
    %v2377 = vrot.slane %v2376, 1
    %v2378 = vadd.f32 %v2376, %v2377
    %s2379 = vtos %v2378
    %s2380 = smul.f32 %s2379, 0.0625
    %2382 = vset.pattern.permute.xlu0 8
    %2383 = vperm.xlu0 %2382, %v2340
    %v2384 = vpop.permute.xlu0 %2383
    %v2386 = vadd.f32 %v2340, %v2384
    %v2387 = vstv %s2380
    %v2388 = vsub.f32 %v2386, %v2387
    %2389 = vst [vmem:[%s10] sm:$0xff] %v2388
    // Predicated region
    $region54: #{critic_forward.1} parent=1 // pred_check
      _
    $region55: #{critic_forward.1} parent=1 // pred_check_branch
      %2391 = sbr.rel (0) target = $region57
    $region56: #{critic_forward.1} parent=1 // pred_region
      _
    $region57: #{critic_forward.1} parent=1 // pred_fallthru
      _
    // Predicated region
    $region58: #{critic_forward.1} parent=1 // pred_check
      _
    $region59: #{critic_forward.1} parent=1 // pred_check_branch
      %2393 = sbr.rel (0) target = $region61
    $region60: #{critic_forward.1} parent=1 // pred_region
      _
    $region61: #{critic_forward.1} parent=1 // pred_fallthru
      _
    // Predicated region
    $region62: #{critic_forward.1} parent=1 // pred_check
      _
    $region63: #{critic_forward.1} parent=1 // pred_check_branch
      %2395 = sbr.rel (0) target = $region65
    $region64: #{critic_forward.1} parent=1 // pred_region
      _
    $region65: #{critic_forward.1} parent=1 // pred_fallthru
      _
    // Predicated region
    $region66: #{critic_forward.1} parent=1 // pred_check
      _
    $region67: #{critic_forward.1} parent=1 // pred_check_branch
      %2397 = sbr.rel (0) target = $region69
    $region68: #{critic_forward.1} parent=1 // pred_region
      _
    $region69: #{critic_forward.1} parent=1 // pred_fallthru
      _
    %2398 = vsyncpa [#allocation3], 1
    %2399 = vsyncpa [#allocation5], 1
    %2400 = vsyncpa [#allocation8], 1

</llo_original>
